<compile_context>
chip_gen: v7x
topology: tpu7x:2x2x1
jax: 0.10.0
libtpu: 0.0.40
codegen_flags: <defaults>
</compile_context>

<pallas_src>
import jax
import jax.numpy as jnp
from jax.experimental import pallas as pl
from jax.experimental.pallas import tpu as pltpu

EPS = 1e-5


def bn_add_relu_kernel(x_ref, skip_ref, gamma_ref, beta_ref, o_ref):
    # x_ref, skip_ref, o_ref: (C_BLK, L);  gamma_ref, beta_ref: (C_BLK, 1)
    x = x_ref[...].astype(jnp.float32)
    L = x.shape[1]
    inv_L = 1.0 / L  # static python float

    # Per-channel reductions on the MXU (idle otherwise) instead of an
    # XLU-heavy cross-lane reduce chain: s1 = sum(x), s2 = sum(x*x) over L.
    ones = jnp.ones((L, 1), dtype=jnp.float32)
    s1 = jnp.dot(x, ones, preferred_element_type=jnp.float32)       # (C_BLK, 1)
    s2 = jnp.dot(x * x, ones, preferred_element_type=jnp.float32)   # (C_BLK, 1)

    mean = s1 * inv_L
    # Single-pass biased variance E[x^2] - mean^2 (fine for BN-scale
    # activations); clamp to >= 0 to guard against tiny cancellation error.
    var = jnp.maximum(s2 * inv_L - mean * mean, 0.0)

    scale = gamma_ref[...] * jax.lax.rsqrt(var + EPS)   # (C_BLK, 1)
    shift = beta_ref[...] - mean * scale                # (C_BLK, 1)

    out = skip_ref[...].astype(jnp.float32) + x * scale + shift
    o_ref[...] = jnp.maximum(out, 0.0).astype(o_ref.dtype)


def _pick_c_block(C, L, itemsize=4,
                  vmem_budget_bytes=8 * 1024 * 1024, target_steps=4):
    """Largest multiple-of-8 divisor of C whose double-buffered working set
    (x + skip + out blocks) fits the VMEM budget, preferring >= target_steps
    grid steps so DMAs overlap compute and blocks shard across TensorCores."""
    cands = [d for d in range(8, C + 1, 8) if C % d == 0]
    if not cands:
        return C  # odd/tiny channel counts: single full-C block (full-dim ok)

    def working_set(d):
        return 3 * 2 * d * L * itemsize  # 3 streamed tensors, double-buffered

    fitting = [d for d in cands if working_set(d) <= vmem_budget_bytes]
    if not fitting:
        return min(cands)
    pipelined = [d for d in fitting if C // d >= target_steps]
    return max(pipelined) if pipelined else max(fitting)


def bn_add_relu(x206, x199, gamma, beta):
    """x206: BN input (N,C,H,W); x199: residual (N,C,H,W)."""
    N, C, H, W = x206.shape
    L = N * H * W

    if N == 1:
        # (1,C,H,W) -> (C, H*W): pure reshape, no data movement.
        x_flat = x206.reshape(C, L)
        skip_flat = x199.reshape(C, L)
    else:
        # TODO(synk): for N > 1 these transposes re-stream HBM; prefer an NHWC
        # end-to-end layout or an N-carried accumulator grid instead.
        x_flat = jnp.transpose(x206, (1, 0, 2, 3)).reshape(C, L)
        skip_flat = jnp.transpose(x199, (1, 0, 2, 3)).reshape(C, L)

    g = gamma.reshape(C, 1).astype(jnp.float32)
    b = beta.reshape(C, 1).astype(jnp.float32)

    c_blk = _pick_c_block(C, L, itemsize=4)  # f32 working set (conservative)
    grid = (C // c_blk,)

    out_flat = pl.pallas_call(
        bn_add_relu_kernel,
        out_shape=jax.ShapeDtypeStruct((C, L), x206.dtype),
        grid=grid,
        in_specs=[
            pl.BlockSpec((c_blk, L), lambda i: (i, 0)),
            pl.BlockSpec((c_blk, L), lambda i: (i, 0)),
            pl.BlockSpec((c_blk, 1), lambda i: (i, 0)),
            pl.BlockSpec((c_blk, 1), lambda i: (i, 0)),
        ],
        out_specs=pl.BlockSpec((c_blk, L), lambda i: (i, 0)),
        compiler_params=pltpu.CompilerParams(
            dimension_semantics=("parallel",)),
    )(x_flat, skip_flat, g, b)

    if N == 1:
        return out_flat.reshape(N, C, H, W)
    return jnp.transpose(out_flat.reshape(C, N, H, W), (1, 0, 2, 3))


def reference(x206, x199, gamma, beta):
    x = x206.astype(jnp.float32)
    mean = jnp.mean(x, axis=(0, 2, 3), keepdims=True)
    var = jnp.mean((x - mean) ** 2, axis=(0, 2, 3), keepdims=True)
    y = (x - mean) / jnp.sqrt(var + EPS)
    y = y * gamma.reshape(1, -1, 1, 1) + beta.reshape(1, -1, 1, 1)
    return jnp.maximum(x199.astype(jnp.float32) + y, 0.0).astype(x206.dtype)


if __name__ == "__main__":
    # Shapes consistent with the module: BatchNorm2d(1344), 14x14 feature map.
    N, C, H, W = 1, 1344, 14, 14

    key = jax.random.PRNGKey(0)
    k1, k2 = jax.random.split(key)
    x206 = jax.random.normal(k1, (N, C, H, W), dtype=jnp.float32)
    x199 = jax.random.normal(k2, (N, C, H, W), dtype=jnp.float32)

    # Deterministic parameter init matching PyTorch BatchNorm2d defaults.
    gamma = jnp.ones((C,), dtype=jnp.float32)
    beta = jnp.zeros((C,), dtype=jnp.float32)

    out = jax.block_until_ready(bn_add_relu(x206, x199, gamma, beta))

    ref = reference(x206, x199, gamma, beta)
    assert out.shape == (N, C, H, W)
    err = float(jnp.max(jnp.abs(out - ref)))
    assert err < 1e-4, f"mismatch vs reference: {err}"

    print("KERNEL_OK")
</pallas_src>

<mosaic_0001>
module attributes {stable_mosaic.version = 11 : i64} {
  func.func @bn_add_relu_kernel(%arg0: i32, %arg1: memref<336x196xf32, #tpu.memory_space<vmem>>, %arg2: memref<336x196xf32, #tpu.memory_space<vmem>>, %arg3: memref<336x1xf32, #tpu.memory_space<vmem>>, %arg4: memref<336x1xf32, #tpu.memory_space<vmem>>, %arg5: memref<336x196xf32, #tpu.memory_space<vmem>>) attributes {dimension_semantics = [#tpu.dimension_semantics<parallel>], iteration_bounds = array<i64: 4>, scalar_prefetch = 0 : i64, scratch_operands = 0 : i64, tpu.core_type = #tpu.core_type<tc>, window_params = [{transform_indices = @transform_0, window_bounds = array<i64: 336, 196>}, {transform_indices = @transform_1, window_bounds = array<i64: 336, 196>}, {transform_indices = @transform_2, window_bounds = array<i64: 336, 1>}, {transform_indices = @transform_3, window_bounds = array<i64: 336, 1>}, {transform_indices = @transform_4, window_bounds = array<i64: 336, 196>}]} {
    %c0 = arith.constant 0 : index
    %c0_0 = arith.constant 0 : index
    %0 = vector.load %arg1[%c0, %c0_0] : memref<336x196xf32, #tpu.memory_space<vmem>>, vector<336x196xf32>
    %cst = arith.constant 1.000000e+00 : f32
    %1 = vector.broadcast %cst : f32 to vector<196x1xf32>
    %cst_1 = arith.constant dense<0.000000e+00> : vector<336x1xf32>
    %2 = tpu.matmul %0, %1, %cst_1 {dimension_numbers = #tpu.dot_dimension_numbers<[1], [0], [0], [1], [0, 0, 1, 1], [], []>} : vector<336x196xf32>, vector<196x1xf32>, vector<336x1xf32> -> vector<336x1xf32>
    %3 = arith.mulf %0, %0 : vector<336x196xf32>
    %cst_2 = arith.constant dense<0.000000e+00> : vector<336x1xf32>
    %4 = tpu.matmul %3, %1, %cst_2 {dimension_numbers = #tpu.dot_dimension_numbers<[1], [0], [0], [1], [0, 0, 1, 1], [], []>} : vector<336x196xf32>, vector<196x1xf32>, vector<336x1xf32> -> vector<336x1xf32>
    %cst_3 = arith.constant 0.00510204071 : f32
    %5 = vector.broadcast %cst_3 : f32 to vector<336x1xf32>
    %6 = arith.mulf %2, %5 : vector<336x1xf32>
    %cst_4 = arith.constant 0.00510204071 : f32
    %7 = vector.broadcast %cst_4 : f32 to vector<336x1xf32>
    %8 = arith.mulf %4, %7 : vector<336x1xf32>
    %9 = arith.mulf %6, %6 : vector<336x1xf32>
    %10 = arith.subf %8, %9 : vector<336x1xf32>
    %cst_5 = arith.constant 0.000000e+00 : f32
    %11 = vector.broadcast %cst_5 : f32 to vector<336x1xf32>
    %12 = arith.maximumf %10, %11 : vector<336x1xf32>
    %c0_6 = arith.constant 0 : index
    %c0_7 = arith.constant 0 : index
    %13 = vector.load %arg3[%c0_6, %c0_7] : memref<336x1xf32, #tpu.memory_space<vmem>>, vector<336x1xf32>
    %cst_8 = arith.constant 9.99999974E-6 : f32
    %14 = vector.broadcast %cst_8 : f32 to vector<336x1xf32>
    %15 = arith.addf %12, %14 : vector<336x1xf32>
    %16 = math.rsqrt %15 : vector<336x1xf32>
    %17 = arith.mulf %13, %16 : vector<336x1xf32>
    %c0_9 = arith.constant 0 : index
    %c0_10 = arith.constant 0 : index
    %18 = vector.load %arg4[%c0_9, %c0_10] : memref<336x1xf32, #tpu.memory_space<vmem>>, vector<336x1xf32>
    %19 = arith.mulf %6, %17 : vector<336x1xf32>
    %20 = arith.subf %18, %19 : vector<336x1xf32>
    %c0_11 = arith.constant 0 : index
    %c0_12 = arith.constant 0 : index
    %21 = vector.load %arg2[%c0_11, %c0_12] : memref<336x196xf32, #tpu.memory_space<vmem>>, vector<336x196xf32>
    %22 = vector.broadcast %17 : vector<336x1xf32> to vector<336x196xf32>
    %23 = arith.mulf %0, %22 : vector<336x196xf32>
    %24 = arith.addf %21, %23 : vector<336x196xf32>
    %25 = vector.broadcast %20 : vector<336x1xf32> to vector<336x196xf32>
    %26 = arith.addf %24, %25 : vector<336x196xf32>
    %cst_13 = arith.constant 0.000000e+00 : f32
    %27 = vector.broadcast %cst_13 : f32 to vector<336x196xf32>
    %28 = arith.maximumf %26, %27 : vector<336x196xf32>
    %c0_14 = arith.constant 0 : index
    %c0_15 = arith.constant 0 : index
    %29 = vector.load %arg5[%c0_14, %c0_15] : memref<336x196xf32, #tpu.memory_space<vmem>>, vector<336x196xf32>
    tpu.vector_store %arg5[%c0_14, %c0_15], %28 {strides = array<i32>} : memref<336x196xf32, #tpu.memory_space<vmem>>, vector<336x196xf32>,
    return
  }
  func.func @transform_0(%arg0: i32) -> (i32, i32) {
    %c0_i32 = arith.constant 0 : i32
    %c0_i32_0 = arith.constant 0 : i32
    return %arg0, %c0_i32 : i32, i32
  }
  func.func @transform_1(%arg0: i32) -> (i32, i32) {
    %c0_i32 = arith.constant 0 : i32
    %c0_i32_0 = arith.constant 0 : i32
    return %arg0, %c0_i32 : i32, i32
  }
  func.func @transform_2(%arg0: i32) -> (i32, i32) {
    %c0_i32 = arith.constant 0 : i32
    %c0_i32_0 = arith.constant 0 : i32
    return %arg0, %c0_i32 : i32, i32
  }
  func.func @transform_3(%arg0: i32) -> (i32, i32) {
    %c0_i32 = arith.constant 0 : i32
    %c0_i32_0 = arith.constant 0 : i32
    return %arg0, %c0_i32 : i32, i32
  }
  func.func @transform_4(%arg0: i32) -> (i32, i32) {
    %c0_i32 = arith.constant 0 : i32
    %c0_i32_0 = arith.constant 0 : i32
    return %arg0, %c0_i32 : i32, i32
  }
}

</mosaic_0001>

<llo_original>
// kernel: tpu_custom_call.1
$region0: #{tpu_custom_call.1}
  #allocation0 [shape = 'u32[]', space=smem, size = 0x4, offset = 0x4, fixed_abs, tag = 'smem constant byte address 0x4 - core index']
  #allocation1 [shape = 'u32[144,128]{1,0:T(1,128)}', space=vmem, size = 0x12000, scoped, tag = 'internal scratch']
  %s0 = inlined_call_operand.vmem [shape: f32[1344,196], index: 0, kind: input, shape index: {}]
  %s1 = inlined_call_operand.vmem [shape: f32[1344,196], index: 1, kind: input, shape index: {}]
  %s2 = inlined_call_operand.vmem [shape: f32[1344,1], index: 2, kind: input, shape index: {}]
  %s3 = inlined_call_operand.vmem [shape: f32[1344,1], index: 3, kind: input, shape index: {}]
  %s4 = inlined_call_operand.vmem [shape: f32[1344,196], index: 4, kind: output, shape index: {}]
  %s5 = sld [smem:[#allocation0]]
  $region49: #{tpu_custom_call.1} parent=0
    _
  %s7 = ssub.s32 1, %s5
  %s8 = scalar_select 0, %s7, %s5
  loop: start=0, step=1, limit=6
  $region2: #{tpu_custom_call.1} parent=0 // loop_pre_header
    _
  $region3: #{tpu_custom_call.1} parent=0 // loop_header
    %s10 = sphi 0, %s14
    %p11 = scmp.ge.s32.totalorder %s10, 6
    %s20 = sphi 0, %s22
    %s23 = sphi 0, %s20
    %s24 = sphi 0, %s23
    %s40 = sphi 0, %s24
    %s46 = sphi 0, %s48
    %s49 = sphi 0, %s46
    %s50 = sphi 0, %s49
    %s66 = sphi 0, %s50
    %s72 = sphi 0, %s74
    %s75 = sphi 0, %s72
    %s76 = sphi 0, %s75
    %s92 = sphi 0, %s76
    %s98 = sphi 0, %s100
    %s101 = sphi 0, %s98
    %s102 = sphi 0, %s101
    %s118 = sphi 0, %s102
    %s124 = sphi 0, %s126
    %s127 = sphi 0, %s124
    %s128 = sphi 0, %s127
    %s144 = sphi 0, %s128
  $region4: #{tpu_custom_call.1} parent=0 // loop_header_branch
    %13 = sbr.rel (%p11) target = $region8
  $region5: #{tpu_custom_call.1} parent=0 // loop_body
    %s15 = ssub.s32 %s10, 1
    %s16 = ssub.s32 %s10, 2
    %s17 = sadd.s32 %s10, 1
    %s18 = ssub.s32 %s10, %s17
    %p19 = scmp.eq.s32.totalorder %s18, 0
    %s21 = sadd.s32 %s20, 1
    %s22 = scalar_select %p19, %s20, %s21
    %p25 = pneg %p19
    %p26 = scmp.eq.s32.totalorder %s10, 3
    %p27 = por %p25, %p26
    %p28 = scmp.ne.s32.totalorder %s20, %s23
    %p29 = scmp.eq.s32.totalorder %s10, 0
    %p30 = por %p28, %p29
    %p31 = scmp.ne.s32.totalorder %s20, %s23
    %p32 = scmp.eq.s32.totalorder %s15, 3
    %p33 = por %p31, %p32
    %p34 = scmp.ne.s32.totalorder %s23, %s24
    %p35 = scmp.eq.s32.totalorder %s15, 0
    %p36 = por %p34, %p35
    %p37 = scmp.ne.s32.totalorder %s23, %s24
    %p38 = scmp.eq.s32.totalorder %s16, 3
    %p39 = por %p37, %p38
    %p41 = scmp.ne.s32.totalorder %s24, %s40
    %p42 = scmp.eq.s32.totalorder %s16, 0
    %p43 = por %p41, %p42
    %s44 = ssub.s32 %s10, %s17
    %p45 = scmp.eq.s32.totalorder %s44, 0
    %s47 = sadd.s32 %s46, 1
    %s48 = scalar_select %p45, %s46, %s47
    %p51 = pneg %p45
    %p52 = scmp.eq.s32.totalorder %s10, 3
    %p53 = por %p51, %p52
    %p54 = scmp.ne.s32.totalorder %s46, %s49
    %p55 = scmp.eq.s32.totalorder %s10, 0
    %p56 = por %p54, %p55
    %p57 = scmp.ne.s32.totalorder %s46, %s49
    %p58 = scmp.eq.s32.totalorder %s15, 3
    %p59 = por %p57, %p58
    %p60 = scmp.ne.s32.totalorder %s49, %s50
    %p61 = scmp.eq.s32.totalorder %s15, 0
    %p62 = por %p60, %p61
    %p63 = scmp.ne.s32.totalorder %s49, %s50
    %p64 = scmp.eq.s32.totalorder %s16, 3
    %p65 = por %p63, %p64
    %p67 = scmp.ne.s32.totalorder %s50, %s66
    %p68 = scmp.eq.s32.totalorder %s16, 0
    %p69 = por %p67, %p68
    %s70 = ssub.s32 %s10, %s17
    %p71 = scmp.eq.s32.totalorder %s70, 0
    %s73 = sadd.s32 %s72, 1
    %s74 = scalar_select %p71, %s72, %s73
    %p77 = pneg %p71
    %p78 = scmp.eq.s32.totalorder %s10, 3
    %p79 = por %p77, %p78
    %p80 = scmp.ne.s32.totalorder %s72, %s75
    %p81 = scmp.eq.s32.totalorder %s10, 0
    %p82 = por %p80, %p81
    %p83 = scmp.ne.s32.totalorder %s72, %s75
    %p84 = scmp.eq.s32.totalorder %s15, 3
    %p85 = por %p83, %p84
    %p86 = scmp.ne.s32.totalorder %s75, %s76
    %p87 = scmp.eq.s32.totalorder %s15, 0
    %p88 = por %p86, %p87
    %p89 = scmp.ne.s32.totalorder %s75, %s76
    %p90 = scmp.eq.s32.totalorder %s16, 3
    %p91 = por %p89, %p90
    %p93 = scmp.ne.s32.totalorder %s76, %s92
    %p94 = scmp.eq.s32.totalorder %s16, 0
    %p95 = por %p93, %p94
    %s96 = ssub.s32 %s10, %s17
    %p97 = scmp.eq.s32.totalorder %s96, 0
    %s99 = sadd.s32 %s98, 1
    %s100 = scalar_select %p97, %s98, %s99
    %p103 = pneg %p97
    %p104 = scmp.eq.s32.totalorder %s10, 3
    %p105 = por %p103, %p104
    %p106 = scmp.ne.s32.totalorder %s98, %s101
    %p107 = scmp.eq.s32.totalorder %s10, 0
    %p108 = por %p106, %p107
    %p109 = scmp.ne.s32.totalorder %s98, %s101
    %p110 = scmp.eq.s32.totalorder %s15, 3
    %p111 = por %p109, %p110
    %p112 = scmp.ne.s32.totalorder %s101, %s102
    %p113 = scmp.eq.s32.totalorder %s15, 0
    %p114 = por %p112, %p113
    %p115 = scmp.ne.s32.totalorder %s101, %s102
    %p116 = scmp.eq.s32.totalorder %s16, 3
    %p117 = por %p115, %p116
    %p119 = scmp.ne.s32.totalorder %s102, %s118
    %p120 = scmp.eq.s32.totalorder %s16, 0
    %p121 = por %p119, %p120
    %s122 = ssub.s32 %s10, %s17
    %p123 = scmp.eq.s32.totalorder %s122, 0
    %s125 = sadd.s32 %s124, 1
    %s126 = scalar_select %p123, %s124, %s125
    %p129 = pneg %p123
    %p130 = scmp.eq.s32.totalorder %s10, 3
    %p131 = por %p129, %p130
    %p132 = scmp.ne.s32.totalorder %s124, %s127
    %p133 = scmp.eq.s32.totalorder %s10, 0
    %p134 = por %p132, %p133
    %p135 = scmp.ne.s32.totalorder %s124, %s127
    %p136 = scmp.eq.s32.totalorder %s15, 3
    %p137 = por %p135, %p136
    %p138 = scmp.ne.s32.totalorder %s127, %s128
    %p139 = scmp.eq.s32.totalorder %s15, 0
    %p140 = por %p138, %p139
    %p141 = scmp.ne.s32.totalorder %s127, %s128
    %p142 = scmp.eq.s32.totalorder %s16, 3
    %p143 = por %p141, %p142
    %p145 = scmp.ne.s32.totalorder %s128, %s144
    %p146 = scmp.eq.s32.totalorder %s16, 0
    %p147 = por %p145, %p146
    %p148 = scmp.le.s32.totalorder 1, %s10
    %p149 = scmp.lt.s32.totalorder %s10, 5
    %p150 = pnand %p148, %p149
    %p151 = pneg %p150
    // Predicated region
    $region9: #{tpu_custom_call.1} parent=5 // pred_check
      _
    $region10: #{tpu_custom_call.1} parent=5 // pred_check_branch
      %153 = sbr.rel (%p150) target = $region12
    $region11: #{tpu_custom_call.1} parent=5 // pred_region
      %s154 = ssub.s32 %s10, 1
    $region12: #{tpu_custom_call.1} parent=5 // pred_fallthru
      _
    %p155 = scmp.lt.s32.totalorder %s10, 4
    // Predicated region
    $region13: #{tpu_custom_call.1} parent=5 // pred_check
      %p156 = pneg %p155
    $region14: #{tpu_custom_call.1} parent=5 // pred_check_branch
      %158 = sbr.rel (%p156) target = $region16
    $region15: #{tpu_custom_call.1} parent=5 // pred_region
      // Predicated region
      $region17: #{tpu_custom_call.1} parent=15 // pred_check
        %p159 = pneg %p30
      $region18: #{tpu_custom_call.1} parent=15 // pred_check_branch
        %161 = sbr.rel (%p159) target = $region20
      $region19: #{tpu_custom_call.1} parent=15 // pred_region
        %s162 = smul.u32 42, %s10
        %p163 = scmp.lt.s32.totalorder %s162, 167
        %s164 = scalar_select %p163, %s162, 167
        %s165 = smul.addr %s164, 2
        %s166 = smul.addr %s165, 8
        %s167 = scalar_lea.vmem %s0, %s166
        %s168 = smul.u32 42, %s10
      $region20: #{tpu_custom_call.1} parent=15 // pred_fallthru
        _
      // Predicated region
      $region21: #{tpu_custom_call.1} parent=15 // pred_check
        %p169 = pneg %p56
      $region22: #{tpu_custom_call.1} parent=15 // pred_check_branch
        %171 = sbr.rel (%p169) target = $region24
      $region23: #{tpu_custom_call.1} parent=15 // pred_region
        %s172 = smul.u32 42, %s10
        %p173 = scmp.lt.s32.totalorder %s172, 167
        %s174 = scalar_select %p173, %s172, 167
        %s175 = smul.addr %s174, 2
        %s176 = smul.addr %s175, 8
        %s177 = scalar_lea.vmem %s1, %s176
        %s178 = smul.u32 42, %s10
      $region24: #{tpu_custom_call.1} parent=15 // pred_fallthru
        _
      // Predicated region
      $region25: #{tpu_custom_call.1} parent=15 // pred_check
        %p179 = pneg %p82
      $region26: #{tpu_custom_call.1} parent=15 // pred_check_branch
        %181 = sbr.rel (%p179) target = $region28
      $region27: #{tpu_custom_call.1} parent=15 // pred_region
        %s182 = smul.u32 42, %s10
        %p183 = scmp.lt.s32.totalorder %s182, 167
        %s184 = scalar_select %p183, %s182, 167
        %s185 = smul.addr %s184, 8
        %s186 = scalar_lea.vmem %s2, %s185
        %s187 = smul.u32 42, %s10
      $region28: #{tpu_custom_call.1} parent=15 // pred_fallthru
        _
      // Predicated region
      $region29: #{tpu_custom_call.1} parent=15 // pred_check
        %p188 = pneg %p108
      $region30: #{tpu_custom_call.1} parent=15 // pred_check_branch
        %190 = sbr.rel (%p188) target = $region32
      $region31: #{tpu_custom_call.1} parent=15 // pred_region
        %s191 = smul.u32 42, %s10
        %p192 = scmp.lt.s32.totalorder %s191, 167
        %s193 = scalar_select %p192, %s191, 167
        %s194 = smul.addr %s193, 8
        %s195 = scalar_lea.vmem %s3, %s194
        %s196 = smul.u32 42, %s10
      $region32: #{tpu_custom_call.1} parent=15 // pred_fallthru
        _
    $region16: #{tpu_custom_call.1} parent=5 // pred_fallthru
      _
    %p197 = scmp.le.s32.totalorder 1, %s10
    %p198 = scmp.lt.s32.totalorder %s10, 5
    %p199 = pnand %p197, %p198
    %p200 = pneg %p199
    // Predicated region
    $region33: #{tpu_custom_call.1} parent=5 // pred_check
      _
    $region34: #{tpu_custom_call.1} parent=5 // pred_check_branch
      %202 = sbr.rel (%p199) target = $region36
    $region35: #{tpu_custom_call.1} parent=5 // pred_region
      %s203 = ssub.s32 %s10, 1
      %s204 = smul.u32 42, %s15
      %p205 = scmp.lt.s32.totalorder %s204, 167
      %s206 = scalar_select %p205, %s204, 167
      %s207 = smul.addr %s206, 2
      %s208 = smul.addr %s207, 8
      %s209 = scalar_lea.vmem %s0, %s208
      %p210 = pneg %p36
      %p211 = pneg %p33
      %s212 = smul.u32 42, %s15
      %p213 = scmp.lt.s32.totalorder %s212, 167
      %s214 = scalar_select %p213, %s212, 167
      %s215 = smul.addr %s214, 2
      %s216 = smul.addr %s215, 8
      %s217 = scalar_lea.vmem %s1, %s216
      %p218 = pneg %p62
      %p219 = pneg %p59
      %s220 = smul.u32 42, %s15
      %p221 = scmp.lt.s32.totalorder %s220, 167
      %s222 = scalar_select %p221, %s220, 167
      %s223 = smul.addr %s222, 8
      %s224 = scalar_lea.vmem %s2, %s223
      %p225 = pneg %p88
      %p226 = pneg %p85
      %s227 = smul.u32 42, %s15
      %p228 = scmp.lt.s32.totalorder %s227, 167
      %s229 = scalar_select %p228, %s227, 167
      %s230 = smul.addr %s229, 8
      %s231 = scalar_lea.vmem %s3, %s230
      %p232 = pneg %p114
      %p233 = pneg %p111
      %p234 = pneg %p140
      %p235 = pneg %p137
      %s236 = smul.u32 42, %s15
      %p237 = scmp.lt.s32.totalorder %s236, 167
      %s238 = scalar_select %p237, %s236, 167
      %s239 = smul.addr %s238, 2
      %s240 = smul.addr %s239, 8
      %s241 = scalar_lea.vmem %s4, %s240
      %s242 = smul.u32 42, %s15
      %p243 = scmp.lt.s32.totalorder %s242, 167
      %s244 = scalar_select %p243, %s242, 167
      %s245 = smul.addr %s244, 2
      %s246 = smul.addr %s245, 8
      %s247 = scalar_lea.vmem %s0, %s246
      %s248 = smul.u32 42, %s15
      %s249 = smul.u32 42, %s15
      %p250 = scmp.lt.s32.totalorder %s249, 167
      %s251 = scalar_select %p250, %s249, 167
      %s252 = smul.addr %s251, 2
      %s253 = smul.addr %s252, 8
      %s254 = scalar_lea.vmem %s1, %s253
      %s255 = smul.u32 42, %s15
      %s256 = smul.u32 42, %s15
      %p257 = scmp.lt.s32.totalorder %s256, 167
      %s258 = scalar_select %p257, %s256, 167
      %s259 = smul.addr %s258, 8
      %s260 = scalar_lea.vmem %s2, %s259
      %s261 = smul.u32 42, %s15
      %s262 = smul.u32 42, %s15
      %p263 = scmp.lt.s32.totalorder %s262, 167
      %s264 = scalar_select %p263, %s262, 167
      %s265 = smul.addr %s264, 8
      %s266 = scalar_lea.vmem %s3, %s265
      %s267 = smul.u32 42, %s15
      %s268 = smul.u32 42, %s15
      %p269 = scmp.lt.s32.totalorder %s268, 167
      %s270 = scalar_select %p269, %s268, 167
      %s271 = smul.addr %s270, 2
      %s272 = smul.addr %s271, 8
      %s273 = scalar_lea.vmem %s4, %s272
      %s274 = smul.u32 42, %s15
      %v275 = vld [vmem:[%s247] sm:$0xff]
      %v276 = vld [vmem:[%s247 + $0x8] sm:$0xff]
      %v277 = vld [vmem:[%s247 + $0x10] sm:$0xff]
      %v278 = vld [vmem:[%s247 + $0x18] sm:$0xff]
      %v279 = vld [vmem:[%s247 + $0x20] sm:$0xff]
      %v280 = vld [vmem:[%s247 + $0x28] sm:$0xff]
      %v281 = vld [vmem:[%s247 + $0x30] sm:$0xff]
      %v282 = vld [vmem:[%s247 + $0x38] sm:$0xff]
      %v283 = vld [vmem:[%s247 + $0x40] sm:$0xff]
      %v284 = vld [vmem:[%s247 + $0x48] sm:$0xff]
      %v285 = vld [vmem:[%s247 + $0x50] sm:$0xff]
      %v286 = vld [vmem:[%s247 + $0x58] sm:$0xff]
      %v287 = vld [vmem:[%s247 + $0x60] sm:$0xff]
      %v288 = vld [vmem:[%s247 + $0x68] sm:$0xff]
      %v289 = vld [vmem:[%s247 + $0x70] sm:$0xff]
      %v290 = vld [vmem:[%s247 + $0x78] sm:$0xff]
      %v291 = vld [vmem:[%s247 + $0x80] sm:$0xff]
      %v292 = vld [vmem:[%s247 + $0x88] sm:$0xff]
      %v293 = vld [vmem:[%s247 + $0x90] sm:$0xff]
      %v294 = vld [vmem:[%s247 + $0x98] sm:$0xff]
      %v295 = vld [vmem:[%s247 + $0xa0] sm:$0xff]
      %v296 = vld [vmem:[%s247 + $0xa8] sm:$0xff]
      %v297 = vld [vmem:[%s247 + $0xb0] sm:$0xff]
      %v298 = vld [vmem:[%s247 + $0xb8] sm:$0xff]
      %v299 = vld [vmem:[%s247 + $0xc0] sm:$0xff]
      %v300 = vld [vmem:[%s247 + $0xc8] sm:$0xff]
      %v301 = vld [vmem:[%s247 + $0xd0] sm:$0xff]
      %v302 = vld [vmem:[%s247 + $0xd8] sm:$0xff]
      %v303 = vld [vmem:[%s247 + $0xe0] sm:$0xff]
      %v304 = vld [vmem:[%s247 + $0xe8] sm:$0xff]
      %v305 = vld [vmem:[%s247 + $0xf0] sm:$0xff]
      %v306 = vld [vmem:[%s247 + $0xf8] sm:$0xff]
      %v307 = vld [vmem:[%s247 + $0x100] sm:$0xff]
      %v308 = vld [vmem:[%s247 + $0x108] sm:$0xff]
      %v309 = vld [vmem:[%s247 + $0x110] sm:$0xff]
      %v310 = vld [vmem:[%s247 + $0x118] sm:$0xff]
      %v311 = vld [vmem:[%s247 + $0x120] sm:$0xff]
      %v312 = vld [vmem:[%s247 + $0x128] sm:$0xff]
      %v313 = vld [vmem:[%s247 + $0x130] sm:$0xff]
      %v314 = vld [vmem:[%s247 + $0x138] sm:$0xff]
      %v315 = vld [vmem:[%s247 + $0x140] sm:$0xff]
      %v316 = vld [vmem:[%s247 + $0x148] sm:$0xff]
      %v317 = vld [vmem:[%s247 + $0x150] sm:$0xff]
      %v318 = vld [vmem:[%s247 + $0x158] sm:$0xff]
      %v319 = vld [vmem:[%s247 + $0x160] sm:$0xff]
      %v320 = vld [vmem:[%s247 + $0x168] sm:$0xff]
      %v321 = vld [vmem:[%s247 + $0x170] sm:$0xff]
      %v322 = vld [vmem:[%s247 + $0x178] sm:$0xff]
      %v323 = vld [vmem:[%s247 + $0x180] sm:$0xff]
      %v324 = vld [vmem:[%s247 + $0x188] sm:$0xff]
      %v325 = vld [vmem:[%s247 + $0x190] sm:$0xff]
      %v326 = vld [vmem:[%s247 + $0x198] sm:$0xff]
      %v327 = vld [vmem:[%s247 + $0x1a0] sm:$0xff]
      %v328 = vld [vmem:[%s247 + $0x1a8] sm:$0xff]
      %v329 = vld [vmem:[%s247 + $0x1b0] sm:$0xff]
      %v330 = vld [vmem:[%s247 + $0x1b8] sm:$0xff]
      %v331 = vld [vmem:[%s247 + $0x1c0] sm:$0xff]
      %v332 = vld [vmem:[%s247 + $0x1c8] sm:$0xff]
      %v333 = vld [vmem:[%s247 + $0x1d0] sm:$0xff]
      %v334 = vld [vmem:[%s247 + $0x1d8] sm:$0xff]
      %v335 = vld [vmem:[%s247 + $0x1e0] sm:$0xff]
      %v336 = vld [vmem:[%s247 + $0x1e8] sm:$0xff]
      %v337 = vld [vmem:[%s247 + $0x1f0] sm:$0xff]
      %v338 = vld [vmem:[%s247 + $0x1f8] sm:$0xff]
      %v339 = vld [vmem:[%s247 + $0x200] sm:$0xff]
      %v340 = vld [vmem:[%s247 + $0x208] sm:$0xff]
      %v341 = vld [vmem:[%s247 + $0x210] sm:$0xff]
      %v342 = vld [vmem:[%s247 + $0x218] sm:$0xff]
      %v343 = vld [vmem:[%s247 + $0x220] sm:$0xff]
      %v344 = vld [vmem:[%s247 + $0x228] sm:$0xff]
      %v345 = vld [vmem:[%s247 + $0x230] sm:$0xff]
      %v346 = vld [vmem:[%s247 + $0x238] sm:$0xff]
      %v347 = vld [vmem:[%s247 + $0x240] sm:$0xff]
      %v348 = vld [vmem:[%s247 + $0x248] sm:$0xff]
      %v349 = vld [vmem:[%s247 + $0x250] sm:$0xff]
      %v350 = vld [vmem:[%s247 + $0x258] sm:$0xff]
      %v351 = vld [vmem:[%s247 + $0x260] sm:$0xff]
      %v352 = vld [vmem:[%s247 + $0x268] sm:$0xff]
      %v353 = vld [vmem:[%s247 + $0x270] sm:$0xff]
      %v354 = vld [vmem:[%s247 + $0x278] sm:$0xff]
      %v355 = vld [vmem:[%s247 + $0x280] sm:$0xff]
      %v356 = vld [vmem:[%s247 + $0x288] sm:$0xff]
      %v357 = vld [vmem:[%s247 + $0x290] sm:$0xff]
      %v358 = vld [vmem:[%s247 + $0x298] sm:$0xff]
      %vm359 = vcmask 556032
      %v361 = vsel %vm359, %v276, 0
      %v364 = vsel %vm359, %v278, 0
      %v367 = vsel %vm359, %v280, 0
      %v370 = vsel %vm359, %v282, 0
      %v373 = vsel %vm359, %v284, 0
      %v376 = vsel %vm359, %v286, 0
      %v379 = vsel %vm359, %v288, 0
      %v382 = vsel %vm359, %v290, 0
      %v385 = vsel %vm359, %v292, 0
      %v388 = vsel %vm359, %v294, 0
      %v391 = vsel %vm359, %v296, 0
      %v394 = vsel %vm359, %v298, 0
      %v397 = vsel %vm359, %v300, 0
      %v400 = vsel %vm359, %v302, 0
      %v403 = vsel %vm359, %v304, 0
      %v406 = vsel %vm359, %v306, 0
      %v409 = vsel %vm359, %v308, 0
      %v412 = vsel %vm359, %v310, 0
      %v415 = vsel %vm359, %v312, 0
      %v418 = vsel %vm359, %v314, 0
      %v421 = vsel %vm359, %v316, 0
      %v424 = vsel %vm359, %v318, 0
      %v427 = vsel %vm359, %v320, 0
      %v430 = vsel %vm359, %v322, 0
      %v433 = vsel %vm359, %v324, 0
      %v436 = vsel %vm359, %v326, 0
      %v439 = vsel %vm359, %v328, 0
      %v442 = vsel %vm359, %v330, 0
      %v445 = vsel %vm359, %v332, 0
      %v448 = vsel %vm359, %v334, 0
      %v451 = vsel %vm359, %v336, 0
      %v454 = vsel %vm359, %v338, 0
      %v457 = vsel %vm359, %v340, 0
      %v460 = vsel %vm359, %v342, 0
      %v463 = vsel %vm359, %v344, 0
      %v466 = vsel %vm359, %v346, 0
      %v469 = vsel %vm359, %v348, 0
      %v472 = vsel %vm359, %v350, 0
      %v475 = vsel %vm359, %v352, 0
      %v478 = vsel %vm359, %v354, 0
      %v481 = vsel %vm359, %v356, 0
      %v484 = vsel %vm359, %v358, 0
      %vm486 = vcmask 1043456
      %v488 = vsel %vm486, 1.0, 0
      %490 = vmatprep.subr.mxu0 0.0
      %491 = vmatpush1.msra.mxu0 1.0
      %492 = vmatprep.subr.mxu0 0.0
      %493 = vmatpush1.msra.mxu0 1.0
      %494 = vmatprep.subr.mxu0 0.0
      %495 = vmatpush1.msra.mxu0 1.0
      %496 = vmatprep.subr.mxu0 0.0
      %497 = vmatpush1.msra.mxu0 1.0
      %498 = vmatprep.subr.mxu0 0.0
      %499 = vmatpush1.msra.mxu0 1.0
      %500 = vmatprep.subr.mxu0 0.0
      %501 = vmatpush1.msra.mxu0 1.0
      %502 = vmatprep.subr.mxu0 0.0
      %503 = vmatpush1.msra.mxu0 1.0
      %504 = vmatprep.subr.mxu0 0.0
      %505 = vmatpush1.msra.mxu0 1.0
      %506 = vmatprep.subr.mxu0 0.0
      %507 = vmatpush1.msra.mxu0 1.0
      %508 = vmatprep.subr.mxu0 0.0
      %509 = vmatpush1.msra.mxu0 1.0
      %510 = vmatprep.subr.mxu0 0.0
      %511 = vmatpush1.msra.mxu0 1.0
      %512 = vmatprep.subr.mxu0 0.0
      %513 = vmatpush1.msra.mxu0 1.0
      %514 = vmatprep.subr.mxu0 0.0
      %515 = vmatpush1.msra.mxu0 1.0
      %516 = vmatprep.subr.mxu0 0.0
      %517 = vmatpush1.msra.mxu0 1.0
      %518 = vmatprep.subr.mxu0 0.0
      %519 = vmatpush1.msra.mxu0 1.0
      %520 = vmatprep.subr.mxu0 0.0
      %521 = vmatpush1.msra.mxu0 1.0
      %522 = vmatprep.subr.mxu0 0.0
      %523 = vmatpush1.msra.mxu0 1.0
      %524 = vmatprep.subr.mxu0 0.0
      %525 = vmatpush1.msra.mxu0 1.0
      %526 = vmatprep.subr.mxu0 0.0
      %527 = vmatpush1.msra.mxu0 1.0
      %528 = vmatprep.subr.mxu0 0.0
      %529 = vmatpush1.msra.mxu0 1.0
      %530 = vmatprep.subr.mxu0 0.0
      %531 = vmatpush1.msra.mxu0 1.0
      %532 = vmatprep.subr.mxu0 0.0
      %533 = vmatpush1.msra.mxu0 1.0
      %534 = vmatprep.subr.mxu0 0.0
      %535 = vmatpush1.msra.mxu0 1.0
      %536 = vmatprep.subr.mxu0 0.0
      %537 = vmatpush1.msra.mxu0 1.0
      %538 = vmatprep.subr.mxu0 0.0
      %539 = vmatpush1.msra.mxu0 %v488
      %540 = vmatprep.subr.mxu0 0.0
      %541 = vmatpush1.msra.mxu0 0.0
      %542 = vmatprep.subr.mxu0 0.0
      %543 = vmatpush1.msra.mxu0 0.0
      %544 = vmatprep.subr.mxu0 0.0
      %545 = vmatpush1.msra.mxu0 0.0
      %546 = vmatprep.subr.mxu0 0.0
      %547 = vmatpush1.msra.mxu0 0.0
      %548 = vmatprep.subr.mxu0 0.0
      %549 = vmatpush1.msra.mxu0 0.0
      %550 = vmatprep.subr.mxu0 0.0
      %551 = vmatpush1.msra.mxu0 0.0
      %552 = vmatprep.subr.mxu0 0.0
      %553 = vmatpush1.msra.mxu0 0.0
      %554 = vmatprep.mubr.f32.mxu0 %v361
      %555 = vmatmul.mubr.f32.gmra.mrb[0].mxu0 %v275
      %v556 = vpop.f32.mrb[0].mxu0
      %v557 = vadd.f32 0.0, %v556
      %v558 = vpop.f32.mrb[0].mxu0
      %559 = vmatprep.mubr.f32.mxu0 %v364
      %560 = vmatmul.mubr.f32.gmra.mrb[0].mxu0 %v277
      %v561 = vpop.f32.mrb[0].mxu0
      %v562 = vadd.f32 0.0, %v561
      %v563 = vpop.f32.mrb[0].mxu0
      %564 = vmatprep.mubr.f32.mxu0 %v367
      %565 = vmatmul.mubr.f32.gmra.mrb[0].mxu0 %v279
      %v566 = vpop.f32.mrb[0].mxu0
      %v567 = vadd.f32 0.0, %v566
      %v568 = vpop.f32.mrb[0].mxu0
      %569 = vmatprep.mubr.f32.mxu0 %v370
      %570 = vmatmul.mubr.f32.gmra.mrb[0].mxu0 %v281
      %v571 = vpop.f32.mrb[0].mxu0
      %v572 = vadd.f32 0.0, %v571
      %v573 = vpop.f32.mrb[0].mxu0
      %574 = vmatprep.mubr.f32.mxu0 %v373
      %575 = vmatmul.mubr.f32.gmra.mrb[0].mxu0 %v283
      %v576 = vpop.f32.mrb[0].mxu0
      %v577 = vadd.f32 0.0, %v576
      %v578 = vpop.f32.mrb[0].mxu0
      %579 = vmatprep.mubr.f32.mxu0 %v376
      %580 = vmatmul.mubr.f32.gmra.mrb[0].mxu0 %v285
      %v581 = vpop.f32.mrb[0].mxu0
      %v582 = vadd.f32 0.0, %v581
      %v583 = vpop.f32.mrb[0].mxu0
      %584 = vmatprep.mubr.f32.mxu0 %v379
      %585 = vmatmul.mubr.f32.gmra.mrb[0].mxu0 %v287
      %v586 = vpop.f32.mrb[0].mxu0
      %v587 = vadd.f32 0.0, %v586
      %v588 = vpop.f32.mrb[0].mxu0
      %589 = vmatprep.mubr.f32.mxu0 %v382
      %590 = vmatmul.mubr.f32.gmra.mrb[0].mxu0 %v289
      %v591 = vpop.f32.mrb[0].mxu0
      %v592 = vadd.f32 0.0, %v591
      %v593 = vpop.f32.mrb[0].mxu0
      %594 = vmatprep.mubr.f32.mxu0 %v385
      %595 = vmatmul.mubr.f32.gmra.mrb[0].mxu0 %v291
      %v596 = vpop.f32.mrb[0].mxu0
      %v597 = vadd.f32 0.0, %v596
      %v598 = vpop.f32.mrb[0].mxu0
      %599 = vmatprep.mubr.f32.mxu0 %v388
      %600 = vmatmul.mubr.f32.gmra.mrb[0].mxu0 %v293
      %v601 = vpop.f32.mrb[0].mxu0
      %v602 = vadd.f32 0.0, %v601
      %v603 = vpop.f32.mrb[0].mxu0
      %604 = vmatprep.mubr.f32.mxu0 %v391
      %605 = vmatmul.mubr.f32.gmra.mrb[0].mxu0 %v295
      %v606 = vpop.f32.mrb[0].mxu0
      %v607 = vadd.f32 0.0, %v606
      %v608 = vpop.f32.mrb[0].mxu0
      %609 = vmatprep.mubr.f32.mxu0 %v394
      %610 = vmatmul.mubr.f32.gmra.mrb[0].mxu0 %v297
      %v611 = vpop.f32.mrb[0].mxu0
      %v612 = vadd.f32 0.0, %v611
      %v613 = vpop.f32.mrb[0].mxu0
      %614 = vmatprep.mubr.f32.mxu0 %v397
      %615 = vmatmul.mubr.f32.gmra.mrb[0].mxu0 %v299
      %v616 = vpop.f32.mrb[0].mxu0
      %v617 = vadd.f32 0.0, %v616
      %v618 = vpop.f32.mrb[0].mxu0
      %619 = vmatprep.mubr.f32.mxu0 %v400
      %620 = vmatmul.mubr.f32.gmra.mrb[0].mxu0 %v301
      %v621 = vpop.f32.mrb[0].mxu0
      %v622 = vadd.f32 0.0, %v621
      %v623 = vpop.f32.mrb[0].mxu0
      %624 = vmatprep.mubr.f32.mxu0 %v403
      %625 = vmatmul.mubr.f32.gmra.mrb[0].mxu0 %v303
      %v626 = vpop.f32.mrb[0].mxu0
      %v627 = vadd.f32 0.0, %v626
      %v628 = vpop.f32.mrb[0].mxu0
      %629 = vmatprep.mubr.f32.mxu0 %v406
      %630 = vmatmul.mubr.f32.gmra.mrb[0].mxu0 %v305
      %v631 = vpop.f32.mrb[0].mxu0
      %v632 = vadd.f32 0.0, %v631
      %v633 = vpop.f32.mrb[0].mxu0
      %634 = vmatprep.mubr.f32.mxu0 %v409
      %635 = vmatmul.mubr.f32.gmra.mrb[0].mxu0 %v307
      %v636 = vpop.f32.mrb[0].mxu0
      %v637 = vadd.f32 0.0, %v636
      %v638 = vpop.f32.mrb[0].mxu0
      %639 = vmatprep.mubr.f32.mxu0 %v412
      %640 = vmatmul.mubr.f32.gmra.mrb[0].mxu0 %v309
      %v641 = vpop.f32.mrb[0].mxu0
      %v642 = vadd.f32 0.0, %v641
      %v643 = vpop.f32.mrb[0].mxu0
      %644 = vmatprep.mubr.f32.mxu0 %v415
      %645 = vmatmul.mubr.f32.gmra.mrb[0].mxu0 %v311
      %v646 = vpop.f32.mrb[0].mxu0
      %v647 = vadd.f32 0.0, %v646
      %v648 = vpop.f32.mrb[0].mxu0
      %649 = vmatprep.mubr.f32.mxu0 %v418
      %650 = vmatmul.mubr.f32.gmra.mrb[0].mxu0 %v313
      %v651 = vpop.f32.mrb[0].mxu0
      %v652 = vadd.f32 0.0, %v651
      %v653 = vpop.f32.mrb[0].mxu0
      %654 = vmatprep.mubr.f32.mxu0 %v421
      %655 = vmatmul.mubr.f32.gmra.mrb[0].mxu0 %v315
      %v656 = vpop.f32.mrb[0].mxu0
      %v657 = vadd.f32 0.0, %v656
      %v658 = vpop.f32.mrb[0].mxu0
      %659 = vmatprep.mubr.f32.mxu0 %v424
      %660 = vmatmul.mubr.f32.gmra.mrb[0].mxu0 %v317
      %v661 = vpop.f32.mrb[0].mxu0
      %v662 = vadd.f32 0.0, %v661
      %v663 = vpop.f32.mrb[0].mxu0
      %664 = vmatprep.mubr.f32.mxu0 %v427
      %665 = vmatmul.mubr.f32.gmra.mrb[0].mxu0 %v319
      %v666 = vpop.f32.mrb[0].mxu0
      %v667 = vadd.f32 0.0, %v666
      %v668 = vpop.f32.mrb[0].mxu0
      %669 = vmatprep.mubr.f32.mxu0 %v430
      %670 = vmatmul.mubr.f32.gmra.mrb[0].mxu0 %v321
      %v671 = vpop.f32.mrb[0].mxu0
      %v672 = vadd.f32 0.0, %v671
      %v673 = vpop.f32.mrb[0].mxu0
      %674 = vmatprep.mubr.f32.mxu0 %v433
      %675 = vmatmul.mubr.f32.gmra.mrb[0].mxu0 %v323
      %v676 = vpop.f32.mrb[0].mxu0
      %v677 = vadd.f32 0.0, %v676
      %v678 = vpop.f32.mrb[0].mxu0
      %679 = vmatprep.mubr.f32.mxu0 %v436
      %680 = vmatmul.mubr.f32.gmra.mrb[0].mxu0 %v325
      %v681 = vpop.f32.mrb[0].mxu0
      %v682 = vadd.f32 0.0, %v681
      %v683 = vpop.f32.mrb[0].mxu0
      %684 = vmatprep.mubr.f32.mxu0 %v439
      %685 = vmatmul.mubr.f32.gmra.mrb[0].mxu0 %v327
      %v686 = vpop.f32.mrb[0].mxu0
      %v687 = vadd.f32 0.0, %v686
      %v688 = vpop.f32.mrb[0].mxu0
      %689 = vmatprep.mubr.f32.mxu0 %v442
      %690 = vmatmul.mubr.f32.gmra.mrb[0].mxu0 %v329
      %v691 = vpop.f32.mrb[0].mxu0
      %v692 = vadd.f32 0.0, %v691
      %v693 = vpop.f32.mrb[0].mxu0
      %694 = vmatprep.mubr.f32.mxu0 %v445
      %695 = vmatmul.mubr.f32.gmra.mrb[0].mxu0 %v331
      %v696 = vpop.f32.mrb[0].mxu0
      %v697 = vadd.f32 0.0, %v696
      %v698 = vpop.f32.mrb[0].mxu0
      %699 = vmatprep.mubr.f32.mxu0 %v448
      %700 = vmatmul.mubr.f32.gmra.mrb[0].mxu0 %v333
      %v701 = vpop.f32.mrb[0].mxu0
      %v702 = vadd.f32 0.0, %v701
      %v703 = vpop.f32.mrb[0].mxu0
      %704 = vmatprep.mubr.f32.mxu0 %v451
      %705 = vmatmul.mubr.f32.gmra.mrb[0].mxu0 %v335
      %v706 = vpop.f32.mrb[0].mxu0
      %v707 = vadd.f32 0.0, %v706
      %v708 = vpop.f32.mrb[0].mxu0
      %709 = vmatprep.mubr.f32.mxu0 %v454
      %710 = vmatmul.mubr.f32.gmra.mrb[0].mxu0 %v337
      %v711 = vpop.f32.mrb[0].mxu0
      %v712 = vadd.f32 0.0, %v711
      %v713 = vpop.f32.mrb[0].mxu0
      %714 = vmatprep.mubr.f32.mxu0 %v457
      %715 = vmatmul.mubr.f32.gmra.mrb[0].mxu0 %v339
      %v716 = vpop.f32.mrb[0].mxu0
      %v717 = vadd.f32 0.0, %v716
      %v718 = vpop.f32.mrb[0].mxu0
      %719 = vmatprep.mubr.f32.mxu0 %v460
      %720 = vmatmul.mubr.f32.gmra.mrb[0].mxu0 %v341
      %v721 = vpop.f32.mrb[0].mxu0
      %v722 = vadd.f32 0.0, %v721
      %v723 = vpop.f32.mrb[0].mxu0
      %724 = vmatprep.mubr.f32.mxu0 %v463
      %725 = vmatmul.mubr.f32.gmra.mrb[0].mxu0 %v343
      %v726 = vpop.f32.mrb[0].mxu0
      %v727 = vadd.f32 0.0, %v726
      %v728 = vpop.f32.mrb[0].mxu0
      %729 = vmatprep.mubr.f32.mxu0 %v466
      %730 = vmatmul.mubr.f32.gmra.mrb[0].mxu0 %v345
      %v731 = vpop.f32.mrb[0].mxu0
      %v732 = vadd.f32 0.0, %v731
      %v733 = vpop.f32.mrb[0].mxu0
      %734 = vmatprep.mubr.f32.mxu0 %v469
      %735 = vmatmul.mubr.f32.gmra.mrb[0].mxu0 %v347
      %v736 = vpop.f32.mrb[0].mxu0
      %v737 = vadd.f32 0.0, %v736
      %v738 = vpop.f32.mrb[0].mxu0
      %739 = vmatprep.mubr.f32.mxu0 %v472
      %740 = vmatmul.mubr.f32.gmra.mrb[0].mxu0 %v349
      %v741 = vpop.f32.mrb[0].mxu0
      %v742 = vadd.f32 0.0, %v741
      %v743 = vpop.f32.mrb[0].mxu0
      %744 = vmatprep.mubr.f32.mxu0 %v475
      %745 = vmatmul.mubr.f32.gmra.mrb[0].mxu0 %v351
      %v746 = vpop.f32.mrb[0].mxu0
      %v747 = vadd.f32 0.0, %v746
      %v748 = vpop.f32.mrb[0].mxu0
      %749 = vmatprep.mubr.f32.mxu0 %v478
      %750 = vmatmul.mubr.f32.gmra.mrb[0].mxu0 %v353
      %v751 = vpop.f32.mrb[0].mxu0
      %v752 = vadd.f32 0.0, %v751
      %v753 = vpop.f32.mrb[0].mxu0
      %754 = vmatprep.mubr.f32.mxu0 %v481
      %755 = vmatmul.mubr.f32.gmra.mrb[0].mxu0 %v355
      %v756 = vpop.f32.mrb[0].mxu0
      %v757 = vadd.f32 0.0, %v756
      %v758 = vpop.f32.mrb[0].mxu0
      %759 = vmatprep.mubr.f32.mxu0 %v484
      %760 = vmatmul.mubr.f32.gmra.mrb[0].mxu0 %v357
      %v761 = vpop.f32.mrb[0].mxu0
      %v762 = vadd.f32 0.0, %v761
      %v763 = vpop.f32.mrb[0].mxu0
      %764 = vdwg.mxu0
      %v765 = vmul.f32 %v275, %v275
      %v766 = vmul.f32 %v276, %v276
      %v767 = vmul.f32 %v277, %v277
      %v768 = vmul.f32 %v278, %v278
      %v769 = vmul.f32 %v279, %v279
      %v770 = vmul.f32 %v280, %v280
      %v771 = vmul.f32 %v281, %v281
      %v772 = vmul.f32 %v282, %v282
      %v773 = vmul.f32 %v283, %v283
      %v774 = vmul.f32 %v284, %v284
      %v775 = vmul.f32 %v285, %v285
      %v776 = vmul.f32 %v286, %v286
      %v777 = vmul.f32 %v287, %v287
      %v778 = vmul.f32 %v288, %v288
      %v779 = vmul.f32 %v289, %v289
      %v780 = vmul.f32 %v290, %v290
      %v781 = vmul.f32 %v291, %v291
      %v782 = vmul.f32 %v292, %v292
      %v783 = vmul.f32 %v293, %v293
      %v784 = vmul.f32 %v294, %v294
      %v785 = vmul.f32 %v295, %v295
      %v786 = vmul.f32 %v296, %v296
      %v787 = vmul.f32 %v297, %v297
      %v788 = vmul.f32 %v298, %v298
      %v789 = vmul.f32 %v299, %v299
      %v790 = vmul.f32 %v300, %v300
      %v791 = vmul.f32 %v301, %v301
      %v792 = vmul.f32 %v302, %v302
      %v793 = vmul.f32 %v303, %v303
      %v794 = vmul.f32 %v304, %v304
      %v795 = vmul.f32 %v305, %v305
      %v796 = vmul.f32 %v306, %v306
      %v797 = vmul.f32 %v307, %v307
      %v798 = vmul.f32 %v308, %v308
      %v799 = vmul.f32 %v309, %v309
      %v800 = vmul.f32 %v310, %v310
      %v801 = vmul.f32 %v311, %v311
      %v802 = vmul.f32 %v312, %v312
      %v803 = vmul.f32 %v313, %v313
      %v804 = vmul.f32 %v314, %v314
      %v805 = vmul.f32 %v315, %v315
      %v806 = vmul.f32 %v316, %v316
      %v807 = vmul.f32 %v317, %v317
      %v808 = vmul.f32 %v318, %v318
      %v809 = vmul.f32 %v319, %v319
      %v810 = vmul.f32 %v320, %v320
      %v811 = vmul.f32 %v321, %v321
      %v812 = vmul.f32 %v322, %v322
      %v813 = vmul.f32 %v323, %v323
      %v814 = vmul.f32 %v324, %v324
      %v815 = vmul.f32 %v325, %v325
      %v816 = vmul.f32 %v326, %v326
      %v817 = vmul.f32 %v327, %v327
      %v818 = vmul.f32 %v328, %v328
      %v819 = vmul.f32 %v329, %v329
      %v820 = vmul.f32 %v330, %v330
      %v821 = vmul.f32 %v331, %v331
      %v822 = vmul.f32 %v332, %v332
      %v823 = vmul.f32 %v333, %v333
      %v824 = vmul.f32 %v334, %v334
      %v825 = vmul.f32 %v335, %v335
      %v826 = vmul.f32 %v336, %v336
      %v827 = vmul.f32 %v337, %v337
      %v828 = vmul.f32 %v338, %v338
      %v829 = vmul.f32 %v339, %v339
      %v830 = vmul.f32 %v340, %v340
      %v831 = vmul.f32 %v341, %v341
      %v832 = vmul.f32 %v342, %v342
      %v833 = vmul.f32 %v343, %v343
      %v834 = vmul.f32 %v344, %v344
      %v835 = vmul.f32 %v345, %v345
      %v836 = vmul.f32 %v346, %v346
      %v837 = vmul.f32 %v347, %v347
      %v838 = vmul.f32 %v348, %v348
      %v839 = vmul.f32 %v349, %v349
      %v840 = vmul.f32 %v350, %v350
      %v841 = vmul.f32 %v351, %v351
      %v842 = vmul.f32 %v352, %v352
      %v843 = vmul.f32 %v353, %v353
      %v844 = vmul.f32 %v354, %v354
      %v845 = vmul.f32 %v355, %v355
      %v846 = vmul.f32 %v356, %v356
      %v847 = vmul.f32 %v357, %v357
      %v848 = vmul.f32 %v358, %v358
      %v850 = vsel %vm359, %v766, 0
      %v853 = vsel %vm359, %v768, 0
      %v856 = vsel %vm359, %v770, 0
      %v859 = vsel %vm359, %v772, 0
      %v862 = vsel %vm359, %v774, 0
      %v865 = vsel %vm359, %v776, 0
      %v868 = vsel %vm359, %v778, 0
      %v871 = vsel %vm359, %v780, 0
      %v874 = vsel %vm359, %v782, 0
      %v877 = vsel %vm359, %v784, 0
      %v880 = vsel %vm359, %v786, 0
      %v883 = vsel %vm359, %v788, 0
      %v886 = vsel %vm359, %v790, 0
      %v889 = vsel %vm359, %v792, 0
      %v892 = vsel %vm359, %v794, 0
      %v895 = vsel %vm359, %v796, 0
      %v898 = vsel %vm359, %v798, 0
      %v901 = vsel %vm359, %v800, 0
      %v904 = vsel %vm359, %v802, 0
      %v907 = vsel %vm359, %v804, 0
      %v910 = vsel %vm359, %v806, 0
      %v913 = vsel %vm359, %v808, 0
      %v916 = vsel %vm359, %v810, 0
      %v919 = vsel %vm359, %v812, 0
      %v922 = vsel %vm359, %v814, 0
      %v925 = vsel %vm359, %v816, 0
      %v928 = vsel %vm359, %v818, 0
      %v931 = vsel %vm359, %v820, 0
      %v934 = vsel %vm359, %v822, 0
      %v937 = vsel %vm359, %v824, 0
      %v940 = vsel %vm359, %v826, 0
      %v943 = vsel %vm359, %v828, 0
      %v946 = vsel %vm359, %v830, 0
      %v949 = vsel %vm359, %v832, 0
      %v952 = vsel %vm359, %v834, 0
      %v955 = vsel %vm359, %v836, 0
      %v958 = vsel %vm359, %v838, 0
      %v961 = vsel %vm359, %v840, 0
      %v964 = vsel %vm359, %v842, 0
      %v967 = vsel %vm359, %v844, 0
      %v970 = vsel %vm359, %v846, 0
      %v973 = vsel %vm359, %v848, 0
      %975 = vmatprep.subr.mxu0 0.0
      %976 = vmatpush1.msra.mxu0 1.0
      %977 = vmatprep.subr.mxu0 0.0
      %978 = vmatpush1.msra.mxu0 1.0
      %979 = vmatprep.subr.mxu0 0.0
      %980 = vmatpush1.msra.mxu0 1.0
      %981 = vmatprep.subr.mxu0 0.0
      %982 = vmatpush1.msra.mxu0 1.0
      %983 = vmatprep.subr.mxu0 0.0
      %984 = vmatpush1.msra.mxu0 1.0
      %985 = vmatprep.subr.mxu0 0.0
      %986 = vmatpush1.msra.mxu0 1.0
      %987 = vmatprep.subr.mxu0 0.0
      %988 = vmatpush1.msra.mxu0 1.0
      %989 = vmatprep.subr.mxu0 0.0
      %990 = vmatpush1.msra.mxu0 1.0
      %991 = vmatprep.subr.mxu0 0.0
      %992 = vmatpush1.msra.mxu0 1.0
      %993 = vmatprep.subr.mxu0 0.0
      %994 = vmatpush1.msra.mxu0 1.0
      %995 = vmatprep.subr.mxu0 0.0
      %996 = vmatpush1.msra.mxu0 1.0
      %997 = vmatprep.subr.mxu0 0.0
      %998 = vmatpush1.msra.mxu0 1.0
      %999 = vmatprep.subr.mxu0 0.0
      %1000 = vmatpush1.msra.mxu0 1.0
      %1001 = vmatprep.subr.mxu0 0.0
      %1002 = vmatpush1.msra.mxu0 1.0
      %1003 = vmatprep.subr.mxu0 0.0
      %1004 = vmatpush1.msra.mxu0 1.0
      %1005 = vmatprep.subr.mxu0 0.0
      %1006 = vmatpush1.msra.mxu0 1.0
      %1007 = vmatprep.subr.mxu0 0.0
      %1008 = vmatpush1.msra.mxu0 1.0
      %1009 = vmatprep.subr.mxu0 0.0
      %1010 = vmatpush1.msra.mxu0 1.0
      %1011 = vmatprep.subr.mxu0 0.0
      %1012 = vmatpush1.msra.mxu0 1.0
      %1013 = vmatprep.subr.mxu0 0.0
      %1014 = vmatpush1.msra.mxu0 1.0
      %1015 = vmatprep.subr.mxu0 0.0
      %1016 = vmatpush1.msra.mxu0 1.0
      %1017 = vmatprep.subr.mxu0 0.0
      %1018 = vmatpush1.msra.mxu0 1.0
      %1019 = vmatprep.subr.mxu0 0.0
      %1020 = vmatpush1.msra.mxu0 1.0
      %1021 = vmatprep.subr.mxu0 0.0
      %1022 = vmatpush1.msra.mxu0 1.0
      %1023 = vmatprep.subr.mxu0 0.0
      %1024 = vmatpush1.msra.mxu0 %v488
      %1025 = vmatprep.subr.mxu0 0.0
      %1026 = vmatpush1.msra.mxu0 0.0
      %1027 = vmatprep.subr.mxu0 0.0
      %1028 = vmatpush1.msra.mxu0 0.0
      %1029 = vmatprep.subr.mxu0 0.0
      %1030 = vmatpush1.msra.mxu0 0.0
      %1031 = vmatprep.subr.mxu0 0.0
      %1032 = vmatpush1.msra.mxu0 0.0
      %1033 = vmatprep.subr.mxu0 0.0
      %1034 = vmatpush1.msra.mxu0 0.0
      %1035 = vmatprep.subr.mxu0 0.0
      %1036 = vmatpush1.msra.mxu0 0.0
      %1037 = vmatprep.subr.mxu0 0.0
      %1038 = vmatpush1.msra.mxu0 0.0
      %1039 = vmatprep.mubr.f32.mxu0 %v850
      %1040 = vmatmul.mubr.f32.gmra.mrb[0].mxu0 %v765
      %v1041 = vpop.f32.mrb[0].mxu0
      %v1042 = vadd.f32 0.0, %v1041
      %v1043 = vpop.f32.mrb[0].mxu0
      %1044 = vmatprep.mubr.f32.mxu0 %v853
      %1045 = vmatmul.mubr.f32.gmra.mrb[0].mxu0 %v767
      %v1046 = vpop.f32.mrb[0].mxu0
      %v1047 = vadd.f32 0.0, %v1046
      %v1048 = vpop.f32.mrb[0].mxu0
      %1049 = vmatprep.mubr.f32.mxu0 %v856
      %1050 = vmatmul.mubr.f32.gmra.mrb[0].mxu0 %v769
      %v1051 = vpop.f32.mrb[0].mxu0
      %v1052 = vadd.f32 0.0, %v1051
      %v1053 = vpop.f32.mrb[0].mxu0
      %1054 = vmatprep.mubr.f32.mxu0 %v859
      %1055 = vmatmul.mubr.f32.gmra.mrb[0].mxu0 %v771
      %v1056 = vpop.f32.mrb[0].mxu0
      %v1057 = vadd.f32 0.0, %v1056
      %v1058 = vpop.f32.mrb[0].mxu0
      %1059 = vmatprep.mubr.f32.mxu0 %v862
      %1060 = vmatmul.mubr.f32.gmra.mrb[0].mxu0 %v773
      %v1061 = vpop.f32.mrb[0].mxu0
      %v1062 = vadd.f32 0.0, %v1061
      %v1063 = vpop.f32.mrb[0].mxu0
      %1064 = vmatprep.mubr.f32.mxu0 %v865
      %1065 = vmatmul.mubr.f32.gmra.mrb[0].mxu0 %v775
      %v1066 = vpop.f32.mrb[0].mxu0
      %v1067 = vadd.f32 0.0, %v1066
      %v1068 = vpop.f32.mrb[0].mxu0
      %1069 = vmatprep.mubr.f32.mxu0 %v868
      %1070 = vmatmul.mubr.f32.gmra.mrb[0].mxu0 %v777
      %v1071 = vpop.f32.mrb[0].mxu0
      %v1072 = vadd.f32 0.0, %v1071
      %v1073 = vpop.f32.mrb[0].mxu0
      %1074 = vmatprep.mubr.f32.mxu0 %v871
      %1075 = vmatmul.mubr.f32.gmra.mrb[0].mxu0 %v779
      %v1076 = vpop.f32.mrb[0].mxu0
      %v1077 = vadd.f32 0.0, %v1076
      %v1078 = vpop.f32.mrb[0].mxu0
      %1079 = vmatprep.mubr.f32.mxu0 %v874
      %1080 = vmatmul.mubr.f32.gmra.mrb[0].mxu0 %v781
      %v1081 = vpop.f32.mrb[0].mxu0
      %v1082 = vadd.f32 0.0, %v1081
      %v1083 = vpop.f32.mrb[0].mxu0
      %1084 = vmatprep.mubr.f32.mxu0 %v877
      %1085 = vmatmul.mubr.f32.gmra.mrb[0].mxu0 %v783
      %v1086 = vpop.f32.mrb[0].mxu0
      %v1087 = vadd.f32 0.0, %v1086
      %v1088 = vpop.f32.mrb[0].mxu0
      %1089 = vmatprep.mubr.f32.mxu0 %v880
      %1090 = vmatmul.mubr.f32.gmra.mrb[0].mxu0 %v785
      %v1091 = vpop.f32.mrb[0].mxu0
      %v1092 = vadd.f32 0.0, %v1091
      %v1093 = vpop.f32.mrb[0].mxu0
      %1094 = vmatprep.mubr.f32.mxu0 %v883
      %1095 = vmatmul.mubr.f32.gmra.mrb[0].mxu0 %v787
      %v1096 = vpop.f32.mrb[0].mxu0
      %v1097 = vadd.f32 0.0, %v1096
      %v1098 = vpop.f32.mrb[0].mxu0
      %1099 = vmatprep.mubr.f32.mxu0 %v886
      %1100 = vmatmul.mubr.f32.gmra.mrb[0].mxu0 %v789
      %v1101 = vpop.f32.mrb[0].mxu0
      %v1102 = vadd.f32 0.0, %v1101
      %v1103 = vpop.f32.mrb[0].mxu0
      %1104 = vmatprep.mubr.f32.mxu0 %v889
      %1105 = vmatmul.mubr.f32.gmra.mrb[0].mxu0 %v791
      %v1106 = vpop.f32.mrb[0].mxu0
      %v1107 = vadd.f32 0.0, %v1106
      %v1108 = vpop.f32.mrb[0].mxu0
      %1109 = vmatprep.mubr.f32.mxu0 %v892
      %1110 = vmatmul.mubr.f32.gmra.mrb[0].mxu0 %v793
      %v1111 = vpop.f32.mrb[0].mxu0
      %v1112 = vadd.f32 0.0, %v1111
      %v1113 = vpop.f32.mrb[0].mxu0
      %1114 = vmatprep.mubr.f32.mxu0 %v895
      %1115 = vmatmul.mubr.f32.gmra.mrb[0].mxu0 %v795
      %v1116 = vpop.f32.mrb[0].mxu0
      %v1117 = vadd.f32 0.0, %v1116
      %v1118 = vpop.f32.mrb[0].mxu0
      %1119 = vmatprep.mubr.f32.mxu0 %v898
      %1120 = vmatmul.mubr.f32.gmra.mrb[0].mxu0 %v797
      %v1121 = vpop.f32.mrb[0].mxu0
      %v1122 = vadd.f32 0.0, %v1121
      %v1123 = vpop.f32.mrb[0].mxu0
      %1124 = vmatprep.mubr.f32.mxu0 %v901
      %1125 = vmatmul.mubr.f32.gmra.mrb[0].mxu0 %v799
      %v1126 = vpop.f32.mrb[0].mxu0
      %v1127 = vadd.f32 0.0, %v1126
      %v1128 = vpop.f32.mrb[0].mxu0
      %1129 = vmatprep.mubr.f32.mxu0 %v904
      %1130 = vmatmul.mubr.f32.gmra.mrb[0].mxu0 %v801
      %v1131 = vpop.f32.mrb[0].mxu0
      %v1132 = vadd.f32 0.0, %v1131
      %v1133 = vpop.f32.mrb[0].mxu0
      %1134 = vmatprep.mubr.f32.mxu0 %v907
      %1135 = vmatmul.mubr.f32.gmra.mrb[0].mxu0 %v803
      %v1136 = vpop.f32.mrb[0].mxu0
      %v1137 = vadd.f32 0.0, %v1136
      %v1138 = vpop.f32.mrb[0].mxu0
      %1139 = vmatprep.mubr.f32.mxu0 %v910
      %1140 = vmatmul.mubr.f32.gmra.mrb[0].mxu0 %v805
      %v1141 = vpop.f32.mrb[0].mxu0
      %v1142 = vadd.f32 0.0, %v1141
      %v1143 = vpop.f32.mrb[0].mxu0
      %1144 = vmatprep.mubr.f32.mxu0 %v913
      %1145 = vmatmul.mubr.f32.gmra.mrb[0].mxu0 %v807
      %v1146 = vpop.f32.mrb[0].mxu0
      %v1147 = vadd.f32 0.0, %v1146
      %v1148 = vpop.f32.mrb[0].mxu0
      %1149 = vmatprep.mubr.f32.mxu0 %v916
      %1150 = vmatmul.mubr.f32.gmra.mrb[0].mxu0 %v809
      %v1151 = vpop.f32.mrb[0].mxu0
      %v1152 = vadd.f32 0.0, %v1151
      %v1153 = vpop.f32.mrb[0].mxu0
      %1154 = vmatprep.mubr.f32.mxu0 %v919
      %1155 = vmatmul.mubr.f32.gmra.mrb[0].mxu0 %v811
      %v1156 = vpop.f32.mrb[0].mxu0
      %v1157 = vadd.f32 0.0, %v1156
      %v1158 = vpop.f32.mrb[0].mxu0
      %1159 = vmatprep.mubr.f32.mxu0 %v922
      %1160 = vmatmul.mubr.f32.gmra.mrb[0].mxu0 %v813
      %v1161 = vpop.f32.mrb[0].mxu0
      %v1162 = vadd.f32 0.0, %v1161
      %v1163 = vpop.f32.mrb[0].mxu0
      %1164 = vmatprep.mubr.f32.mxu0 %v925
      %1165 = vmatmul.mubr.f32.gmra.mrb[0].mxu0 %v815
      %v1166 = vpop.f32.mrb[0].mxu0
      %v1167 = vadd.f32 0.0, %v1166
      %v1168 = vpop.f32.mrb[0].mxu0
      %1169 = vmatprep.mubr.f32.mxu0 %v928
      %1170 = vmatmul.mubr.f32.gmra.mrb[0].mxu0 %v817
      %v1171 = vpop.f32.mrb[0].mxu0
      %v1172 = vadd.f32 0.0, %v1171
      %v1173 = vpop.f32.mrb[0].mxu0
      %1174 = vmatprep.mubr.f32.mxu0 %v931
      %1175 = vmatmul.mubr.f32.gmra.mrb[0].mxu0 %v819
      %v1176 = vpop.f32.mrb[0].mxu0
      %v1177 = vadd.f32 0.0, %v1176
      %v1178 = vpop.f32.mrb[0].mxu0
      %1179 = vmatprep.mubr.f32.mxu0 %v934
      %1180 = vmatmul.mubr.f32.gmra.mrb[0].mxu0 %v821
      %v1181 = vpop.f32.mrb[0].mxu0
      %v1182 = vadd.f32 0.0, %v1181
      %v1183 = vpop.f32.mrb[0].mxu0
      %1184 = vmatprep.mubr.f32.mxu0 %v937
      %1185 = vmatmul.mubr.f32.gmra.mrb[0].mxu0 %v823
      %v1186 = vpop.f32.mrb[0].mxu0
      %v1187 = vadd.f32 0.0, %v1186
      %v1188 = vpop.f32.mrb[0].mxu0
      %1189 = vmatprep.mubr.f32.mxu0 %v940
      %1190 = vmatmul.mubr.f32.gmra.mrb[0].mxu0 %v825
      %v1191 = vpop.f32.mrb[0].mxu0
      %v1192 = vadd.f32 0.0, %v1191
      %v1193 = vpop.f32.mrb[0].mxu0
      %1194 = vmatprep.mubr.f32.mxu0 %v943
      %1195 = vmatmul.mubr.f32.gmra.mrb[0].mxu0 %v827
      %v1196 = vpop.f32.mrb[0].mxu0
      %v1197 = vadd.f32 0.0, %v1196
      %v1198 = vpop.f32.mrb[0].mxu0
      %1199 = vmatprep.mubr.f32.mxu0 %v946
      %1200 = vmatmul.mubr.f32.gmra.mrb[0].mxu0 %v829
      %v1201 = vpop.f32.mrb[0].mxu0
      %v1202 = vadd.f32 0.0, %v1201
      %v1203 = vpop.f32.mrb[0].mxu0
      %1204 = vmatprep.mubr.f32.mxu0 %v949
      %1205 = vmatmul.mubr.f32.gmra.mrb[0].mxu0 %v831
      %v1206 = vpop.f32.mrb[0].mxu0
      %v1207 = vadd.f32 0.0, %v1206
      %v1208 = vpop.f32.mrb[0].mxu0
      %1209 = vmatprep.mubr.f32.mxu0 %v952
      %1210 = vmatmul.mubr.f32.gmra.mrb[0].mxu0 %v833
      %v1211 = vpop.f32.mrb[0].mxu0
      %v1212 = vadd.f32 0.0, %v1211
      %v1213 = vpop.f32.mrb[0].mxu0
      %1214 = vmatprep.mubr.f32.mxu0 %v955
      %1215 = vmatmul.mubr.f32.gmra.mrb[0].mxu0 %v835
      %v1216 = vpop.f32.mrb[0].mxu0
      %v1217 = vadd.f32 0.0, %v1216
      %v1218 = vpop.f32.mrb[0].mxu0
      %1219 = vmatprep.mubr.f32.mxu0 %v958
      %1220 = vmatmul.mubr.f32.gmra.mrb[0].mxu0 %v837
      %v1221 = vpop.f32.mrb[0].mxu0
      %v1222 = vadd.f32 0.0, %v1221
      %v1223 = vpop.f32.mrb[0].mxu0
      %1224 = vmatprep.mubr.f32.mxu0 %v961
      %1225 = vmatmul.mubr.f32.gmra.mrb[0].mxu0 %v839
      %v1226 = vpop.f32.mrb[0].mxu0
      %v1227 = vadd.f32 0.0, %v1226
      %v1228 = vpop.f32.mrb[0].mxu0
      %1229 = vmatprep.mubr.f32.mxu0 %v964
      %1230 = vmatmul.mubr.f32.gmra.mrb[0].mxu0 %v841
      %v1231 = vpop.f32.mrb[0].mxu0
      %v1232 = vadd.f32 0.0, %v1231
      %v1233 = vpop.f32.mrb[0].mxu0
      %1234 = vmatprep.mubr.f32.mxu0 %v967
      %1235 = vmatmul.mubr.f32.gmra.mrb[0].mxu0 %v843
      %v1236 = vpop.f32.mrb[0].mxu0
      %v1237 = vadd.f32 0.0, %v1236
      %v1238 = vpop.f32.mrb[0].mxu0
      %1239 = vmatprep.mubr.f32.mxu0 %v970
      %1240 = vmatmul.mubr.f32.gmra.mrb[0].mxu0 %v845
      %v1241 = vpop.f32.mrb[0].mxu0
      %v1242 = vadd.f32 0.0, %v1241
      %v1243 = vpop.f32.mrb[0].mxu0
      %1244 = vmatprep.mubr.f32.mxu0 %v973
      %1245 = vmatmul.mubr.f32.gmra.mrb[0].mxu0 %v847
      %v1246 = vpop.f32.mrb[0].mxu0
      %v1247 = vadd.f32 0.0, %v1246
      %v1248 = vpop.f32.mrb[0].mxu0
      %1249 = vdwg.mxu0
      %v1250 = vmul.f32 %v557, 0.0051020407
      %v1251 = vmul.f32 %v562, 0.0051020407
      %v1252 = vmul.f32 %v567, 0.0051020407
      %v1253 = vmul.f32 %v572, 0.0051020407
      %v1254 = vmul.f32 %v577, 0.0051020407
      %v1255 = vmul.f32 %v582, 0.0051020407
      %v1256 = vmul.f32 %v587, 0.0051020407
      %v1257 = vmul.f32 %v592, 0.0051020407
      %v1258 = vmul.f32 %v597, 0.0051020407
      %v1259 = vmul.f32 %v602, 0.0051020407
      %v1260 = vmul.f32 %v607, 0.0051020407
      %v1261 = vmul.f32 %v612, 0.0051020407
      %v1262 = vmul.f32 %v617, 0.0051020407
      %v1263 = vmul.f32 %v622, 0.0051020407
      %v1264 = vmul.f32 %v627, 0.0051020407
      %v1265 = vmul.f32 %v632, 0.0051020407
      %v1266 = vmul.f32 %v637, 0.0051020407
      %v1267 = vmul.f32 %v642, 0.0051020407
      %v1268 = vmul.f32 %v647, 0.0051020407
      %v1269 = vmul.f32 %v652, 0.0051020407
      %v1270 = vmul.f32 %v657, 0.0051020407
      %v1271 = vmul.f32 %v662, 0.0051020407
      %v1272 = vmul.f32 %v667, 0.0051020407
      %v1273 = vmul.f32 %v672, 0.0051020407
      %v1274 = vmul.f32 %v677, 0.0051020407
      %v1275 = vmul.f32 %v682, 0.0051020407
      %v1276 = vmul.f32 %v687, 0.0051020407
      %v1277 = vmul.f32 %v692, 0.0051020407
      %v1278 = vmul.f32 %v697, 0.0051020407
      %v1279 = vmul.f32 %v702, 0.0051020407
      %v1280 = vmul.f32 %v707, 0.0051020407
      %v1281 = vmul.f32 %v712, 0.0051020407
      %v1282 = vmul.f32 %v717, 0.0051020407
      %v1283 = vmul.f32 %v722, 0.0051020407
      %v1284 = vmul.f32 %v727, 0.0051020407
      %v1285 = vmul.f32 %v732, 0.0051020407
      %v1286 = vmul.f32 %v737, 0.0051020407
      %v1287 = vmul.f32 %v742, 0.0051020407
      %v1288 = vmul.f32 %v747, 0.0051020407
      %v1289 = vmul.f32 %v752, 0.0051020407
      %v1290 = vmul.f32 %v757, 0.0051020407
      %v1291 = vmul.f32 %v762, 0.0051020407
      %v1292 = vmul.f32 %v1042, 0.0051020407
      %v1293 = vmul.f32 %v1047, 0.0051020407
      %v1294 = vmul.f32 %v1052, 0.0051020407
      %v1295 = vmul.f32 %v1057, 0.0051020407
      %v1296 = vmul.f32 %v1062, 0.0051020407
      %v1297 = vmul.f32 %v1067, 0.0051020407
      %v1298 = vmul.f32 %v1072, 0.0051020407
      %v1299 = vmul.f32 %v1077, 0.0051020407
      %v1300 = vmul.f32 %v1082, 0.0051020407
      %v1301 = vmul.f32 %v1087, 0.0051020407
      %v1302 = vmul.f32 %v1092, 0.0051020407
      %v1303 = vmul.f32 %v1097, 0.0051020407
      %v1304 = vmul.f32 %v1102, 0.0051020407
      %v1305 = vmul.f32 %v1107, 0.0051020407
      %v1306 = vmul.f32 %v1112, 0.0051020407
      %v1307 = vmul.f32 %v1117, 0.0051020407
      %v1308 = vmul.f32 %v1122, 0.0051020407
      %v1309 = vmul.f32 %v1127, 0.0051020407
      %v1310 = vmul.f32 %v1132, 0.0051020407
      %v1311 = vmul.f32 %v1137, 0.0051020407
      %v1312 = vmul.f32 %v1142, 0.0051020407
      %v1313 = vmul.f32 %v1147, 0.0051020407
      %v1314 = vmul.f32 %v1152, 0.0051020407
      %v1315 = vmul.f32 %v1157, 0.0051020407
      %v1316 = vmul.f32 %v1162, 0.0051020407
      %v1317 = vmul.f32 %v1167, 0.0051020407
      %v1318 = vmul.f32 %v1172, 0.0051020407
      %v1319 = vmul.f32 %v1177, 0.0051020407
      %v1320 = vmul.f32 %v1182, 0.0051020407
      %v1321 = vmul.f32 %v1187, 0.0051020407
      %v1322 = vmul.f32 %v1192, 0.0051020407
      %v1323 = vmul.f32 %v1197, 0.0051020407
      %v1324 = vmul.f32 %v1202, 0.0051020407
      %v1325 = vmul.f32 %v1207, 0.0051020407
      %v1326 = vmul.f32 %v1212, 0.0051020407
      %v1327 = vmul.f32 %v1217, 0.0051020407
      %v1328 = vmul.f32 %v1222, 0.0051020407
      %v1329 = vmul.f32 %v1227, 0.0051020407
      %v1330 = vmul.f32 %v1232, 0.0051020407
      %v1331 = vmul.f32 %v1237, 0.0051020407
      %v1332 = vmul.f32 %v1242, 0.0051020407
      %v1333 = vmul.f32 %v1247, 0.0051020407
      %v1334 = vmul.f32 %v1250, %v1250
      %v1335 = vmul.f32 %v1251, %v1251
      %v1336 = vmul.f32 %v1252, %v1252
      %v1337 = vmul.f32 %v1253, %v1253
      %v1338 = vmul.f32 %v1254, %v1254
      %v1339 = vmul.f32 %v1255, %v1255
      %v1340 = vmul.f32 %v1256, %v1256
      %v1341 = vmul.f32 %v1257, %v1257
      %v1342 = vmul.f32 %v1258, %v1258
      %v1343 = vmul.f32 %v1259, %v1259
      %v1344 = vmul.f32 %v1260, %v1260
      %v1345 = vmul.f32 %v1261, %v1261
      %v1346 = vmul.f32 %v1262, %v1262
      %v1347 = vmul.f32 %v1263, %v1263
      %v1348 = vmul.f32 %v1264, %v1264
      %v1349 = vmul.f32 %v1265, %v1265
      %v1350 = vmul.f32 %v1266, %v1266
      %v1351 = vmul.f32 %v1267, %v1267
      %v1352 = vmul.f32 %v1268, %v1268
      %v1353 = vmul.f32 %v1269, %v1269
      %v1354 = vmul.f32 %v1270, %v1270
      %v1355 = vmul.f32 %v1271, %v1271
      %v1356 = vmul.f32 %v1272, %v1272
      %v1357 = vmul.f32 %v1273, %v1273
      %v1358 = vmul.f32 %v1274, %v1274
      %v1359 = vmul.f32 %v1275, %v1275
      %v1360 = vmul.f32 %v1276, %v1276
      %v1361 = vmul.f32 %v1277, %v1277
      %v1362 = vmul.f32 %v1278, %v1278
      %v1363 = vmul.f32 %v1279, %v1279
      %v1364 = vmul.f32 %v1280, %v1280
      %v1365 = vmul.f32 %v1281, %v1281
      %v1366 = vmul.f32 %v1282, %v1282
      %v1367 = vmul.f32 %v1283, %v1283
      %v1368 = vmul.f32 %v1284, %v1284
      %v1369 = vmul.f32 %v1285, %v1285
      %v1370 = vmul.f32 %v1286, %v1286
      %v1371 = vmul.f32 %v1287, %v1287
      %v1372 = vmul.f32 %v1288, %v1288
      %v1373 = vmul.f32 %v1289, %v1289
      %v1374 = vmul.f32 %v1290, %v1290
      %v1375 = vmul.f32 %v1291, %v1291
      %v1376 = vsub.f32 %v1292, %v1334
      %v1377 = vsub.f32 %v1293, %v1335
      %v1378 = vsub.f32 %v1294, %v1336
      %v1379 = vsub.f32 %v1295, %v1337
      %v1380 = vsub.f32 %v1296, %v1338
      %v1381 = vsub.f32 %v1297, %v1339
      %v1382 = vsub.f32 %v1298, %v1340
      %v1383 = vsub.f32 %v1299, %v1341
      %v1384 = vsub.f32 %v1300, %v1342
      %v1385 = vsub.f32 %v1301, %v1343
      %v1386 = vsub.f32 %v1302, %v1344
      %v1387 = vsub.f32 %v1303, %v1345
      %v1388 = vsub.f32 %v1304, %v1346
      %v1389 = vsub.f32 %v1305, %v1347
      %v1390 = vsub.f32 %v1306, %v1348
      %v1391 = vsub.f32 %v1307, %v1349
      %v1392 = vsub.f32 %v1308, %v1350
      %v1393 = vsub.f32 %v1309, %v1351
      %v1394 = vsub.f32 %v1310, %v1352
      %v1395 = vsub.f32 %v1311, %v1353
      %v1396 = vsub.f32 %v1312, %v1354
      %v1397 = vsub.f32 %v1313, %v1355
      %v1398 = vsub.f32 %v1314, %v1356
      %v1399 = vsub.f32 %v1315, %v1357
      %v1400 = vsub.f32 %v1316, %v1358
      %v1401 = vsub.f32 %v1317, %v1359
      %v1402 = vsub.f32 %v1318, %v1360
      %v1403 = vsub.f32 %v1319, %v1361
      %v1404 = vsub.f32 %v1320, %v1362
      %v1405 = vsub.f32 %v1321, %v1363
      %v1406 = vsub.f32 %v1322, %v1364
      %v1407 = vsub.f32 %v1323, %v1365
      %v1408 = vsub.f32 %v1324, %v1366
      %v1409 = vsub.f32 %v1325, %v1367
      %v1410 = vsub.f32 %v1326, %v1368
      %v1411 = vsub.f32 %v1327, %v1369
      %v1412 = vsub.f32 %v1328, %v1370
      %v1413 = vsub.f32 %v1329, %v1371
      %v1414 = vsub.f32 %v1330, %v1372
      %v1415 = vsub.f32 %v1331, %v1373
      %v1416 = vsub.f32 %v1332, %v1374
      %v1417 = vsub.f32 %v1333, %v1375
      %v1418 = vmax.f32 %v1376, 0.0
      %v1419 = vmax.f32 %v1377, 0.0
      %v1420 = vmax.f32 %v1378, 0.0
      %v1421 = vmax.f32 %v1379, 0.0
      %v1422 = vmax.f32 %v1380, 0.0
      %v1423 = vmax.f32 %v1381, 0.0
      %v1424 = vmax.f32 %v1382, 0.0
      %v1425 = vmax.f32 %v1383, 0.0
      %v1426 = vmax.f32 %v1384, 0.0
      %v1427 = vmax.f32 %v1385, 0.0
      %v1428 = vmax.f32 %v1386, 0.0
      %v1429 = vmax.f32 %v1387, 0.0
      %v1430 = vmax.f32 %v1388, 0.0
      %v1431 = vmax.f32 %v1389, 0.0
      %v1432 = vmax.f32 %v1390, 0.0
      %v1433 = vmax.f32 %v1391, 0.0
      %v1434 = vmax.f32 %v1392, 0.0
      %v1435 = vmax.f32 %v1393, 0.0
      %v1436 = vmax.f32 %v1394, 0.0
      %v1437 = vmax.f32 %v1395, 0.0
      %v1438 = vmax.f32 %v1396, 0.0
      %v1439 = vmax.f32 %v1397, 0.0
      %v1440 = vmax.f32 %v1398, 0.0
      %v1441 = vmax.f32 %v1399, 0.0
      %v1442 = vmax.f32 %v1400, 0.0
      %v1443 = vmax.f32 %v1401, 0.0
      %v1444 = vmax.f32 %v1402, 0.0
      %v1445 = vmax.f32 %v1403, 0.0
      %v1446 = vmax.f32 %v1404, 0.0
      %v1447 = vmax.f32 %v1405, 0.0
      %v1448 = vmax.f32 %v1406, 0.0
      %v1449 = vmax.f32 %v1407, 0.0
      %v1450 = vmax.f32 %v1408, 0.0
      %v1451 = vmax.f32 %v1409, 0.0
      %v1452 = vmax.f32 %v1410, 0.0
      %v1453 = vmax.f32 %v1411, 0.0
      %v1454 = vmax.f32 %v1412, 0.0
      %v1455 = vmax.f32 %v1413, 0.0
      %v1456 = vmax.f32 %v1414, 0.0
      %v1457 = vmax.f32 %v1415, 0.0
      %v1458 = vmax.f32 %v1416, 0.0
      %v1459 = vmax.f32 %v1417, 0.0
      %v1460 = vld [vmem:[%s260] sm:$0xff]
      %v1461 = vld [vmem:[%s260 + $0x8] sm:$0xff]
      %v1462 = vld [vmem:[%s260 + $0x10] sm:$0xff]
      %v1463 = vld [vmem:[%s260 + $0x18] sm:$0xff]
      %v1464 = vld [vmem:[%s260 + $0x20] sm:$0xff]
      %v1465 = vld [vmem:[%s260 + $0x28] sm:$0xff]
      %v1466 = vld [vmem:[%s260 + $0x30] sm:$0xff]
      %v1467 = vld [vmem:[%s260 + $0x38] sm:$0xff]
      %v1468 = vld [vmem:[%s260 + $0x40] sm:$0xff]
      %v1469 = vld [vmem:[%s260 + $0x48] sm:$0xff]
      %v1470 = vld [vmem:[%s260 + $0x50] sm:$0xff]
      %v1471 = vld [vmem:[%s260 + $0x58] sm:$0xff]
      %v1472 = vld [vmem:[%s260 + $0x60] sm:$0xff]
      %v1473 = vld [vmem:[%s260 + $0x68] sm:$0xff]
      %v1474 = vld [vmem:[%s260 + $0x70] sm:$0xff]
      %v1475 = vld [vmem:[%s260 + $0x78] sm:$0xff]
      %v1476 = vld [vmem:[%s260 + $0x80] sm:$0xff]
      %v1477 = vld [vmem:[%s260 + $0x88] sm:$0xff]
      %v1478 = vld [vmem:[%s260 + $0x90] sm:$0xff]
      %v1479 = vld [vmem:[%s260 + $0x98] sm:$0xff]
      %v1480 = vld [vmem:[%s260 + $0xa0] sm:$0xff]
      %v1481 = vld [vmem:[%s260 + $0xa8] sm:$0xff]
      %v1482 = vld [vmem:[%s260 + $0xb0] sm:$0xff]
      %v1483 = vld [vmem:[%s260 + $0xb8] sm:$0xff]
      %v1484 = vld [vmem:[%s260 + $0xc0] sm:$0xff]
      %v1485 = vld [vmem:[%s260 + $0xc8] sm:$0xff]
      %v1486 = vld [vmem:[%s260 + $0xd0] sm:$0xff]
      %v1487 = vld [vmem:[%s260 + $0xd8] sm:$0xff]
      %v1488 = vld [vmem:[%s260 + $0xe0] sm:$0xff]
      %v1489 = vld [vmem:[%s260 + $0xe8] sm:$0xff]
      %v1490 = vld [vmem:[%s260 + $0xf0] sm:$0xff]
      %v1491 = vld [vmem:[%s260 + $0xf8] sm:$0xff]
      %v1492 = vld [vmem:[%s260 + $0x100] sm:$0xff]
      %v1493 = vld [vmem:[%s260 + $0x108] sm:$0xff]
      %v1494 = vld [vmem:[%s260 + $0x110] sm:$0xff]
      %v1495 = vld [vmem:[%s260 + $0x118] sm:$0xff]
      %v1496 = vld [vmem:[%s260 + $0x120] sm:$0xff]
      %v1497 = vld [vmem:[%s260 + $0x128] sm:$0xff]
      %v1498 = vld [vmem:[%s260 + $0x130] sm:$0xff]
      %v1499 = vld [vmem:[%s260 + $0x138] sm:$0xff]
      %v1500 = vld [vmem:[%s260 + $0x140] sm:$0xff]
      %v1501 = vld [vmem:[%s260 + $0x148] sm:$0xff]
      %v1502 = vadd.f32 %v1418, 1e-05
      %v1503 = vadd.f32 %v1419, 1e-05
      %v1504 = vadd.f32 %v1420, 1e-05
      %v1505 = vadd.f32 %v1421, 1e-05
      %v1506 = vadd.f32 %v1422, 1e-05
      %v1507 = vadd.f32 %v1423, 1e-05
      %v1508 = vadd.f32 %v1424, 1e-05
      %v1509 = vadd.f32 %v1425, 1e-05
      %v1510 = vadd.f32 %v1426, 1e-05
      %v1511 = vadd.f32 %v1427, 1e-05
      %v1512 = vadd.f32 %v1428, 1e-05
      %v1513 = vadd.f32 %v1429, 1e-05
      %v1514 = vadd.f32 %v1430, 1e-05
      %v1515 = vadd.f32 %v1431, 1e-05
      %v1516 = vadd.f32 %v1432, 1e-05
      %v1517 = vadd.f32 %v1433, 1e-05
      %v1518 = vadd.f32 %v1434, 1e-05
      %v1519 = vadd.f32 %v1435, 1e-05
      %v1520 = vadd.f32 %v1436, 1e-05
      %v1521 = vadd.f32 %v1437, 1e-05
      %v1522 = vadd.f32 %v1438, 1e-05
      %v1523 = vadd.f32 %v1439, 1e-05
      %v1524 = vadd.f32 %v1440, 1e-05
      %v1525 = vadd.f32 %v1441, 1e-05
      %v1526 = vadd.f32 %v1442, 1e-05
      %v1527 = vadd.f32 %v1443, 1e-05
      %v1528 = vadd.f32 %v1444, 1e-05
      %v1529 = vadd.f32 %v1445, 1e-05
      %v1530 = vadd.f32 %v1446, 1e-05
      %v1531 = vadd.f32 %v1447, 1e-05
      %v1532 = vadd.f32 %v1448, 1e-05
      %v1533 = vadd.f32 %v1449, 1e-05
      %v1534 = vadd.f32 %v1450, 1e-05
      %v1535 = vadd.f32 %v1451, 1e-05
      %v1536 = vadd.f32 %v1452, 1e-05
      %v1537 = vadd.f32 %v1453, 1e-05
      %v1538 = vadd.f32 %v1454, 1e-05
      %v1539 = vadd.f32 %v1455, 1e-05
      %v1540 = vadd.f32 %v1456, 1e-05
      %v1541 = vadd.f32 %v1457, 1e-05
      %v1542 = vadd.f32 %v1458, 1e-05
      %v1543 = vadd.f32 %v1459, 1e-05
      %v1544 = vrsqrt.pop %v1502
      %v1545 = vrsqrt.pop %v1503
      %v1546 = vrsqrt.pop %v1504
      %v1547 = vrsqrt.pop %v1505
      %v1548 = vrsqrt.pop %v1506
      %v1549 = vrsqrt.pop %v1507
      %v1550 = vrsqrt.pop %v1508
      %v1551 = vrsqrt.pop %v1509
      %v1552 = vrsqrt.pop %v1510
      %v1553 = vrsqrt.pop %v1511
      %v1554 = vrsqrt.pop %v1512
      %v1555 = vrsqrt.pop %v1513
      %v1556 = vrsqrt.pop %v1514
      %v1557 = vrsqrt.pop %v1515
      %v1558 = vrsqrt.pop %v1516
      %v1559 = vrsqrt.pop %v1517
      %v1560 = vrsqrt.pop %v1518
      %v1561 = vrsqrt.pop %v1519
      %v1562 = vrsqrt.pop %v1520
      %v1563 = vrsqrt.pop %v1521
      %v1564 = vrsqrt.pop %v1522
      %v1565 = vrsqrt.pop %v1523
      %v1566 = vrsqrt.pop %v1524
      %v1567 = vrsqrt.pop %v1525
      %v1568 = vrsqrt.pop %v1526
      %v1569 = vrsqrt.pop %v1527
      %v1570 = vrsqrt.pop %v1528
      %v1571 = vrsqrt.pop %v1529
      %v1572 = vrsqrt.pop %v1530
      %v1573 = vrsqrt.pop %v1531
      %v1574 = vrsqrt.pop %v1532
      %v1575 = vrsqrt.pop %v1533
      %v1576 = vrsqrt.pop %v1534
      %v1577 = vrsqrt.pop %v1535
      %v1578 = vrsqrt.pop %v1536
      %v1579 = vrsqrt.pop %v1537
      %v1580 = vrsqrt.pop %v1538
      %v1581 = vrsqrt.pop %v1539
      %v1582 = vrsqrt.pop %v1540
      %v1583 = vrsqrt.pop %v1541
      %v1584 = vrsqrt.pop %v1542
      %v1585 = vrsqrt.pop %v1543
      %v1586 = vmul.f32 %v1460, %v1544
      %v1587 = vmul.f32 %v1461, %v1545
      %v1588 = vmul.f32 %v1462, %v1546
      %v1589 = vmul.f32 %v1463, %v1547
      %v1590 = vmul.f32 %v1464, %v1548
      %v1591 = vmul.f32 %v1465, %v1549
      %v1592 = vmul.f32 %v1466, %v1550
      %v1593 = vmul.f32 %v1467, %v1551
      %v1594 = vmul.f32 %v1468, %v1552
      %v1595 = vmul.f32 %v1469, %v1553
      %v1596 = vmul.f32 %v1470, %v1554
      %v1597 = vmul.f32 %v1471, %v1555
      %v1598 = vmul.f32 %v1472, %v1556
      %v1599 = vmul.f32 %v1473, %v1557
      %v1600 = vmul.f32 %v1474, %v1558
      %v1601 = vmul.f32 %v1475, %v1559
      %v1602 = vmul.f32 %v1476, %v1560
      %v1603 = vmul.f32 %v1477, %v1561
      %v1604 = vmul.f32 %v1478, %v1562
      %v1605 = vmul.f32 %v1479, %v1563
      %v1606 = vmul.f32 %v1480, %v1564
      %v1607 = vmul.f32 %v1481, %v1565
      %v1608 = vmul.f32 %v1482, %v1566
      %v1609 = vmul.f32 %v1483, %v1567
      %v1610 = vmul.f32 %v1484, %v1568
      %v1611 = vmul.f32 %v1485, %v1569
      %v1612 = vmul.f32 %v1486, %v1570
      %v1613 = vmul.f32 %v1487, %v1571
      %v1614 = vmul.f32 %v1488, %v1572
      %v1615 = vmul.f32 %v1489, %v1573
      %v1616 = vmul.f32 %v1490, %v1574
      %v1617 = vmul.f32 %v1491, %v1575
      %v1618 = vmul.f32 %v1492, %v1576
      %v1619 = vmul.f32 %v1493, %v1577
      %v1620 = vmul.f32 %v1494, %v1578
      %v1621 = vmul.f32 %v1495, %v1579
      %v1622 = vmul.f32 %v1496, %v1580
      %v1623 = vmul.f32 %v1497, %v1581
      %v1624 = vmul.f32 %v1498, %v1582
      %v1625 = vmul.f32 %v1499, %v1583
      %v1626 = vmul.f32 %v1500, %v1584
      %v1627 = vmul.f32 %v1501, %v1585
      %v1628 = vld [vmem:[%s266] sm:$0xff]
      %v1629 = vld [vmem:[%s266 + $0x8] sm:$0xff]
      %v1630 = vld [vmem:[%s266 + $0x10] sm:$0xff]
      %v1631 = vld [vmem:[%s266 + $0x18] sm:$0xff]
      %v1632 = vld [vmem:[%s266 + $0x20] sm:$0xff]
      %v1633 = vld [vmem:[%s266 + $0x28] sm:$0xff]
      %v1634 = vld [vmem:[%s266 + $0x30] sm:$0xff]
      %v1635 = vld [vmem:[%s266 + $0x38] sm:$0xff]
      %v1636 = vld [vmem:[%s266 + $0x40] sm:$0xff]
      %v1637 = vld [vmem:[%s266 + $0x48] sm:$0xff]
      %v1638 = vld [vmem:[%s266 + $0x50] sm:$0xff]
      %v1639 = vld [vmem:[%s266 + $0x58] sm:$0xff]
      %v1640 = vld [vmem:[%s266 + $0x60] sm:$0xff]
      %v1641 = vld [vmem:[%s266 + $0x68] sm:$0xff]
      %v1642 = vld [vmem:[%s266 + $0x70] sm:$0xff]
      %v1643 = vld [vmem:[%s266 + $0x78] sm:$0xff]
      %v1644 = vld [vmem:[%s266 + $0x80] sm:$0xff]
      %v1645 = vld [vmem:[%s266 + $0x88] sm:$0xff]
      %v1646 = vld [vmem:[%s266 + $0x90] sm:$0xff]
      %v1647 = vld [vmem:[%s266 + $0x98] sm:$0xff]
      %v1648 = vld [vmem:[%s266 + $0xa0] sm:$0xff]
      %v1649 = vld [vmem:[%s266 + $0xa8] sm:$0xff]
      %v1650 = vld [vmem:[%s266 + $0xb0] sm:$0xff]
      %v1651 = vld [vmem:[%s266 + $0xb8] sm:$0xff]
      %v1652 = vld [vmem:[%s266 + $0xc0] sm:$0xff]
      %v1653 = vld [vmem:[%s266 + $0xc8] sm:$0xff]
      %v1654 = vld [vmem:[%s266 + $0xd0] sm:$0xff]
      %v1655 = vld [vmem:[%s266 + $0xd8] sm:$0xff]
      %v1656 = vld [vmem:[%s266 + $0xe0] sm:$0xff]
      %v1657 = vld [vmem:[%s266 + $0xe8] sm:$0xff]
      %v1658 = vld [vmem:[%s266 + $0xf0] sm:$0xff]
      %v1659 = vld [vmem:[%s266 + $0xf8] sm:$0xff]
      %v1660 = vld [vmem:[%s266 + $0x100] sm:$0xff]
      %v1661 = vld [vmem:[%s266 + $0x108] sm:$0xff]
      %v1662 = vld [vmem:[%s266 + $0x110] sm:$0xff]
      %v1663 = vld [vmem:[%s266 + $0x118] sm:$0xff]
      %v1664 = vld [vmem:[%s266 + $0x120] sm:$0xff]
      %v1665 = vld [vmem:[%s266 + $0x128] sm:$0xff]
      %v1666 = vld [vmem:[%s266 + $0x130] sm:$0xff]
      %v1667 = vld [vmem:[%s266 + $0x138] sm:$0xff]
      %v1668 = vld [vmem:[%s266 + $0x140] sm:$0xff]
      %v1669 = vld [vmem:[%s266 + $0x148] sm:$0xff]
      %v1670 = vmul.f32 %v1250, %v1586
      %v1671 = vmul.f32 %v1251, %v1587
      %v1672 = vmul.f32 %v1252, %v1588
      %v1673 = vmul.f32 %v1253, %v1589
      %v1674 = vmul.f32 %v1254, %v1590
      %v1675 = vmul.f32 %v1255, %v1591
      %v1676 = vmul.f32 %v1256, %v1592
      %v1677 = vmul.f32 %v1257, %v1593
      %v1678 = vmul.f32 %v1258, %v1594
      %v1679 = vmul.f32 %v1259, %v1595
      %v1680 = vmul.f32 %v1260, %v1596
      %v1681 = vmul.f32 %v1261, %v1597
      %v1682 = vmul.f32 %v1262, %v1598
      %v1683 = vmul.f32 %v1263, %v1599
      %v1684 = vmul.f32 %v1264, %v1600
      %v1685 = vmul.f32 %v1265, %v1601
      %v1686 = vmul.f32 %v1266, %v1602
      %v1687 = vmul.f32 %v1267, %v1603
      %v1688 = vmul.f32 %v1268, %v1604
      %v1689 = vmul.f32 %v1269, %v1605
      %v1690 = vmul.f32 %v1270, %v1606
      %v1691 = vmul.f32 %v1271, %v1607
      %v1692 = vmul.f32 %v1272, %v1608
      %v1693 = vmul.f32 %v1273, %v1609
      %v1694 = vmul.f32 %v1274, %v1610
      %v1695 = vmul.f32 %v1275, %v1611
      %v1696 = vmul.f32 %v1276, %v1612
      %v1697 = vmul.f32 %v1277, %v1613
      %v1698 = vmul.f32 %v1278, %v1614
      %v1699 = vmul.f32 %v1279, %v1615
      %v1700 = vmul.f32 %v1280, %v1616
      %v1701 = vmul.f32 %v1281, %v1617
      %v1702 = vmul.f32 %v1282, %v1618
      %v1703 = vmul.f32 %v1283, %v1619
      %v1704 = vmul.f32 %v1284, %v1620
      %v1705 = vmul.f32 %v1285, %v1621
      %v1706 = vmul.f32 %v1286, %v1622
      %v1707 = vmul.f32 %v1287, %v1623
      %v1708 = vmul.f32 %v1288, %v1624
      %v1709 = vmul.f32 %v1289, %v1625
      %v1710 = vmul.f32 %v1290, %v1626
      %v1711 = vmul.f32 %v1291, %v1627
      %v1712 = vsub.f32 %v1628, %v1670
      %v1713 = vsub.f32 %v1629, %v1671
      %v1714 = vsub.f32 %v1630, %v1672
      %v1715 = vsub.f32 %v1631, %v1673
      %v1716 = vsub.f32 %v1632, %v1674
      %v1717 = vsub.f32 %v1633, %v1675
      %v1718 = vsub.f32 %v1634, %v1676
      %v1719 = vsub.f32 %v1635, %v1677
      %v1720 = vsub.f32 %v1636, %v1678
      %v1721 = vsub.f32 %v1637, %v1679
      %v1722 = vsub.f32 %v1638, %v1680
      %v1723 = vsub.f32 %v1639, %v1681
      %v1724 = vsub.f32 %v1640, %v1682
      %v1725 = vsub.f32 %v1641, %v1683
      %v1726 = vsub.f32 %v1642, %v1684
      %v1727 = vsub.f32 %v1643, %v1685
      %v1728 = vsub.f32 %v1644, %v1686
      %v1729 = vsub.f32 %v1645, %v1687
      %v1730 = vsub.f32 %v1646, %v1688
      %v1731 = vsub.f32 %v1647, %v1689
      %v1732 = vsub.f32 %v1648, %v1690
      %v1733 = vsub.f32 %v1649, %v1691
      %v1734 = vsub.f32 %v1650, %v1692
      %v1735 = vsub.f32 %v1651, %v1693
      %v1736 = vsub.f32 %v1652, %v1694
      %v1737 = vsub.f32 %v1653, %v1695
      %v1738 = vsub.f32 %v1654, %v1696
      %v1739 = vsub.f32 %v1655, %v1697
      %v1740 = vsub.f32 %v1656, %v1698
      %v1741 = vsub.f32 %v1657, %v1699
      %v1742 = vsub.f32 %v1658, %v1700
      %v1743 = vsub.f32 %v1659, %v1701
      %v1744 = vsub.f32 %v1660, %v1702
      %v1745 = vsub.f32 %v1661, %v1703
      %v1746 = vsub.f32 %v1662, %v1704
      %v1747 = vsub.f32 %v1663, %v1705
      %v1748 = vsub.f32 %v1664, %v1706
      %v1749 = vsub.f32 %v1665, %v1707
      %v1750 = vsub.f32 %v1666, %v1708
      %v1751 = vsub.f32 %v1667, %v1709
      %v1752 = vsub.f32 %v1668, %v1710
      %v1753 = vsub.f32 %v1669, %v1711
      %v1754 = vld [vmem:[%s254] sm:$0xff]
      %v1755 = vld [vmem:[%s254 + $0x8] sm:$0xff]
      %v1756 = vld [vmem:[%s254 + $0x10] sm:$0xff]
      %v1757 = vld [vmem:[%s254 + $0x18] sm:$0xff]
      %v1758 = vld [vmem:[%s254 + $0x20] sm:$0xff]
      %v1759 = vld [vmem:[%s254 + $0x28] sm:$0xff]
      %v1760 = vld [vmem:[%s254 + $0x30] sm:$0xff]
      %v1761 = vld [vmem:[%s254 + $0x38] sm:$0xff]
      %v1762 = vld [vmem:[%s254 + $0x40] sm:$0xff]
      %v1763 = vld [vmem:[%s254 + $0x48] sm:$0xff]
      %v1764 = vld [vmem:[%s254 + $0x50] sm:$0xff]
      %v1765 = vld [vmem:[%s254 + $0x58] sm:$0xff]
      %v1766 = vld [vmem:[%s254 + $0x60] sm:$0xff]
      %v1767 = vld [vmem:[%s254 + $0x68] sm:$0xff]
      %v1768 = vld [vmem:[%s254 + $0x70] sm:$0xff]
      %v1769 = vld [vmem:[%s254 + $0x78] sm:$0xff]
      %v1770 = vld [vmem:[%s254 + $0x80] sm:$0xff]
      %v1771 = vld [vmem:[%s254 + $0x88] sm:$0xff]
      %v1772 = vld [vmem:[%s254 + $0x90] sm:$0xff]
      %v1773 = vld [vmem:[%s254 + $0x98] sm:$0xff]
      %v1774 = vld [vmem:[%s254 + $0xa0] sm:$0xff]
      %v1775 = vld [vmem:[%s254 + $0xa8] sm:$0xff]
      %v1776 = vld [vmem:[%s254 + $0xb0] sm:$0xff]
      %v1777 = vld [vmem:[%s254 + $0xb8] sm:$0xff]
      %v1778 = vld [vmem:[%s254 + $0xc0] sm:$0xff]
      %v1779 = vld [vmem:[%s254 + $0xc8] sm:$0xff]
      %v1780 = vld [vmem:[%s254 + $0xd0] sm:$0xff]
      %v1781 = vld [vmem:[%s254 + $0xd8] sm:$0xff]
      %v1782 = vld [vmem:[%s254 + $0xe0] sm:$0xff]
      %v1783 = vld [vmem:[%s254 + $0xe8] sm:$0xff]
      %v1784 = vld [vmem:[%s254 + $0xf0] sm:$0xff]
      %v1785 = vld [vmem:[%s254 + $0xf8] sm:$0xff]
      %v1786 = vld [vmem:[%s254 + $0x100] sm:$0xff]
      %v1787 = vld [vmem:[%s254 + $0x108] sm:$0xff]
      %v1788 = vld [vmem:[%s254 + $0x110] sm:$0xff]
      %v1789 = vld [vmem:[%s254 + $0x118] sm:$0xff]
      %v1790 = vld [vmem:[%s254 + $0x120] sm:$0xff]
      %v1791 = vld [vmem:[%s254 + $0x128] sm:$0xff]
      %v1792 = vld [vmem:[%s254 + $0x130] sm:$0xff]
      %v1793 = vld [vmem:[%s254 + $0x138] sm:$0xff]
      %v1794 = vld [vmem:[%s254 + $0x140] sm:$0xff]
      %v1795 = vld [vmem:[%s254 + $0x148] sm:$0xff]
      %v1796 = vld [vmem:[%s254 + $0x150] sm:$0xff]
      %v1797 = vld [vmem:[%s254 + $0x158] sm:$0xff]
      %v1798 = vld [vmem:[%s254 + $0x160] sm:$0xff]
      %v1799 = vld [vmem:[%s254 + $0x168] sm:$0xff]
      %v1800 = vld [vmem:[%s254 + $0x170] sm:$0xff]
      %v1801 = vld [vmem:[%s254 + $0x178] sm:$0xff]
      %v1802 = vld [vmem:[%s254 + $0x180] sm:$0xff]
      %v1803 = vld [vmem:[%s254 + $0x188] sm:$0xff]
      %v1804 = vld [vmem:[%s254 + $0x190] sm:$0xff]
      %v1805 = vld [vmem:[%s254 + $0x198] sm:$0xff]
      %v1806 = vld [vmem:[%s254 + $0x1a0] sm:$0xff]
      %v1807 = vld [vmem:[%s254 + $0x1a8] sm:$0xff]
      %v1808 = vld [vmem:[%s254 + $0x1b0] sm:$0xff]
      %v1809 = vld [vmem:[%s254 + $0x1b8] sm:$0xff]
      %v1810 = vld [vmem:[%s254 + $0x1c0] sm:$0xff]
      %v1811 = vld [vmem:[%s254 + $0x1c8] sm:$0xff]
      %v1812 = vld [vmem:[%s254 + $0x1d0] sm:$0xff]
      %v1813 = vld [vmem:[%s254 + $0x1d8] sm:$0xff]
      %v1814 = vld [vmem:[%s254 + $0x1e0] sm:$0xff]
      %v1815 = vld [vmem:[%s254 + $0x1e8] sm:$0xff]
      %v1816 = vld [vmem:[%s254 + $0x1f0] sm:$0xff]
      %v1817 = vld [vmem:[%s254 + $0x1f8] sm:$0xff]
      %v1818 = vld [vmem:[%s254 + $0x200] sm:$0xff]
      %v1819 = vld [vmem:[%s254 + $0x208] sm:$0xff]
      %v1820 = vld [vmem:[%s254 + $0x210] sm:$0xff]
      %v1821 = vld [vmem:[%s254 + $0x218] sm:$0xff]
      %v1822 = vld [vmem:[%s254 + $0x220] sm:$0xff]
      %v1823 = vld [vmem:[%s254 + $0x228] sm:$0xff]
      %v1824 = vld [vmem:[%s254 + $0x230] sm:$0xff]
      %v1825 = vld [vmem:[%s254 + $0x238] sm:$0xff]
      %v1826 = vld [vmem:[%s254 + $0x240] sm:$0xff]
      %v1827 = vld [vmem:[%s254 + $0x248] sm:$0xff]
      %v1828 = vld [vmem:[%s254 + $0x250] sm:$0xff]
      %v1829 = vld [vmem:[%s254 + $0x258] sm:$0xff]
      %v1830 = vld [vmem:[%s254 + $0x260] sm:$0xff]
      %v1831 = vld [vmem:[%s254 + $0x268] sm:$0xff]
      %v1832 = vld [vmem:[%s254 + $0x270] sm:$0xff]
      %v1833 = vld [vmem:[%s254 + $0x278] sm:$0xff]
      %v1834 = vld [vmem:[%s254 + $0x280] sm:$0xff]
      %v1835 = vld [vmem:[%s254 + $0x288] sm:$0xff]
      %v1836 = vld [vmem:[%s254 + $0x290] sm:$0xff]
      %v1837 = vld [vmem:[%s254 + $0x298] sm:$0xff]
      %1839 = vset.pattern.permute.xlu0 0
      %1840 = vperm.xlu0 %1839, %v1586
      %v1841 = vpop.permute.xlu0 %1840
      %1844 = vset.pattern.permute.xlu0 0
      %1845 = vperm.xlu0 %1844, %v1587
      %v1846 = vpop.permute.xlu0 %1845
      %1849 = vset.pattern.permute.xlu0 0
      %1850 = vperm.xlu0 %1849, %v1588
      %v1851 = vpop.permute.xlu0 %1850
      %1854 = vset.pattern.permute.xlu0 0
      %1855 = vperm.xlu0 %1854, %v1589
      %v1856 = vpop.permute.xlu0 %1855
      %1859 = vset.pattern.permute.xlu0 0
      %1860 = vperm.xlu0 %1859, %v1590
      %v1861 = vpop.permute.xlu0 %1860
      %1864 = vset.pattern.permute.xlu0 0
      %1865 = vperm.xlu0 %1864, %v1591
      %v1866 = vpop.permute.xlu0 %1865
      %1869 = vset.pattern.permute.xlu0 0
      %1870 = vperm.xlu0 %1869, %v1592
      %v1871 = vpop.permute.xlu0 %1870
      %1874 = vset.pattern.permute.xlu0 0
      %1875 = vperm.xlu0 %1874, %v1593
      %v1876 = vpop.permute.xlu0 %1875
      %1879 = vset.pattern.permute.xlu0 0
      %1880 = vperm.xlu0 %1879, %v1594
      %v1881 = vpop.permute.xlu0 %1880
      %1884 = vset.pattern.permute.xlu0 0
      %1885 = vperm.xlu0 %1884, %v1595
      %v1886 = vpop.permute.xlu0 %1885
      %1889 = vset.pattern.permute.xlu0 0
      %1890 = vperm.xlu0 %1889, %v1596
      %v1891 = vpop.permute.xlu0 %1890
      %1894 = vset.pattern.permute.xlu0 0
      %1895 = vperm.xlu0 %1894, %v1597
      %v1896 = vpop.permute.xlu0 %1895
      %1899 = vset.pattern.permute.xlu0 0
      %1900 = vperm.xlu0 %1899, %v1598
      %v1901 = vpop.permute.xlu0 %1900
      %1904 = vset.pattern.permute.xlu0 0
      %1905 = vperm.xlu0 %1904, %v1599
      %v1906 = vpop.permute.xlu0 %1905
      %1909 = vset.pattern.permute.xlu0 0
      %1910 = vperm.xlu0 %1909, %v1600
      %v1911 = vpop.permute.xlu0 %1910
      %1914 = vset.pattern.permute.xlu0 0
      %1915 = vperm.xlu0 %1914, %v1601
      %v1916 = vpop.permute.xlu0 %1915
      %1919 = vset.pattern.permute.xlu0 0
      %1920 = vperm.xlu0 %1919, %v1602
      %v1921 = vpop.permute.xlu0 %1920
      %1924 = vset.pattern.permute.xlu0 0
      %1925 = vperm.xlu0 %1924, %v1603
      %v1926 = vpop.permute.xlu0 %1925
      %1929 = vset.pattern.permute.xlu0 0
      %1930 = vperm.xlu0 %1929, %v1604
      %v1931 = vpop.permute.xlu0 %1930
      %1934 = vset.pattern.permute.xlu0 0
      %1935 = vperm.xlu0 %1934, %v1605
      %v1936 = vpop.permute.xlu0 %1935
      %1939 = vset.pattern.permute.xlu0 0
      %1940 = vperm.xlu0 %1939, %v1606
      %v1941 = vpop.permute.xlu0 %1940
      %1944 = vset.pattern.permute.xlu0 0
      %1945 = vperm.xlu0 %1944, %v1607
      %v1946 = vpop.permute.xlu0 %1945
      %1949 = vset.pattern.permute.xlu0 0
      %1950 = vperm.xlu0 %1949, %v1608
      %v1951 = vpop.permute.xlu0 %1950
      %1954 = vset.pattern.permute.xlu0 0
      %1955 = vperm.xlu0 %1954, %v1609
      %v1956 = vpop.permute.xlu0 %1955
      %1959 = vset.pattern.permute.xlu0 0
      %1960 = vperm.xlu0 %1959, %v1610
      %v1961 = vpop.permute.xlu0 %1960
      %1964 = vset.pattern.permute.xlu0 0
      %1965 = vperm.xlu0 %1964, %v1611
      %v1966 = vpop.permute.xlu0 %1965
      %1969 = vset.pattern.permute.xlu0 0
      %1970 = vperm.xlu0 %1969, %v1612
      %v1971 = vpop.permute.xlu0 %1970
      %1974 = vset.pattern.permute.xlu0 0
      %1975 = vperm.xlu0 %1974, %v1613
      %v1976 = vpop.permute.xlu0 %1975
      %1979 = vset.pattern.permute.xlu0 0
      %1980 = vperm.xlu0 %1979, %v1614
      %v1981 = vpop.permute.xlu0 %1980
      %1984 = vset.pattern.permute.xlu0 0
      %1985 = vperm.xlu0 %1984, %v1615
      %v1986 = vpop.permute.xlu0 %1985
      %1989 = vset.pattern.permute.xlu0 0
      %1990 = vperm.xlu0 %1989, %v1616
      %v1991 = vpop.permute.xlu0 %1990
      %1994 = vset.pattern.permute.xlu0 0
      %1995 = vperm.xlu0 %1994, %v1617
      %v1996 = vpop.permute.xlu0 %1995
      %1999 = vset.pattern.permute.xlu0 0
      %2000 = vperm.xlu0 %1999, %v1618
      %v2001 = vpop.permute.xlu0 %2000
      %2004 = vset.pattern.permute.xlu0 0
      %2005 = vperm.xlu0 %2004, %v1619
      %v2006 = vpop.permute.xlu0 %2005
      %2009 = vset.pattern.permute.xlu0 0
      %2010 = vperm.xlu0 %2009, %v1620
      %v2011 = vpop.permute.xlu0 %2010
      %2014 = vset.pattern.permute.xlu0 0
      %2015 = vperm.xlu0 %2014, %v1621
      %v2016 = vpop.permute.xlu0 %2015
      %2019 = vset.pattern.permute.xlu0 0
      %2020 = vperm.xlu0 %2019, %v1622
      %v2021 = vpop.permute.xlu0 %2020
      %2024 = vset.pattern.permute.xlu0 0
      %2025 = vperm.xlu0 %2024, %v1623
      %v2026 = vpop.permute.xlu0 %2025
      %2029 = vset.pattern.permute.xlu0 0
      %2030 = vperm.xlu0 %2029, %v1624
      %v2031 = vpop.permute.xlu0 %2030
      %2034 = vset.pattern.permute.xlu0 0
      %2035 = vperm.xlu0 %2034, %v1625
      %v2036 = vpop.permute.xlu0 %2035
      %2039 = vset.pattern.permute.xlu0 0
      %2040 = vperm.xlu0 %2039, %v1626
      %v2041 = vpop.permute.xlu0 %2040
      %2044 = vset.pattern.permute.xlu0 0
      %2045 = vperm.xlu0 %2044, %v1627
      %v2046 = vpop.permute.xlu0 %2045
      %v2048 = vmul.f32 %v275, %v1841
      %v2049 = vmul.f32 %v276, %v1841
      %v2050 = vmul.f32 %v277, %v1846
      %v2051 = vmul.f32 %v278, %v1846
      %v2052 = vmul.f32 %v279, %v1851
      %v2053 = vmul.f32 %v280, %v1851
      %v2054 = vmul.f32 %v281, %v1856
      %v2055 = vmul.f32 %v282, %v1856
      %v2056 = vmul.f32 %v283, %v1861
      %v2057 = vmul.f32 %v284, %v1861
      %v2058 = vmul.f32 %v285, %v1866
      %v2059 = vmul.f32 %v286, %v1866
      %v2060 = vmul.f32 %v287, %v1871
      %v2061 = vmul.f32 %v288, %v1871
      %v2062 = vmul.f32 %v289, %v1876
      %v2063 = vmul.f32 %v290, %v1876
      %v2064 = vmul.f32 %v291, %v1881
      %v2065 = vmul.f32 %v292, %v1881
      %v2066 = vmul.f32 %v293, %v1886
      %v2067 = vmul.f32 %v294, %v1886
      %v2068 = vmul.f32 %v295, %v1891
      %v2069 = vmul.f32 %v296, %v1891
      %v2070 = vmul.f32 %v297, %v1896
      %v2071 = vmul.f32 %v298, %v1896
      %v2072 = vmul.f32 %v299, %v1901
      %v2073 = vmul.f32 %v300, %v1901
      %v2074 = vmul.f32 %v301, %v1906
      %v2075 = vmul.f32 %v302, %v1906
      %v2076 = vmul.f32 %v303, %v1911
      %v2077 = vmul.f32 %v304, %v1911
      %v2078 = vmul.f32 %v305, %v1916
      %v2079 = vmul.f32 %v306, %v1916
      %v2080 = vmul.f32 %v307, %v1921
      %v2081 = vmul.f32 %v308, %v1921
      %v2082 = vmul.f32 %v309, %v1926
      %v2083 = vmul.f32 %v310, %v1926
      %v2084 = vmul.f32 %v311, %v1931
      %v2085 = vmul.f32 %v312, %v1931
      %v2086 = vmul.f32 %v313, %v1936
      %v2087 = vmul.f32 %v314, %v1936
      %v2088 = vmul.f32 %v315, %v1941
      %v2089 = vmul.f32 %v316, %v1941
      %v2090 = vmul.f32 %v317, %v1946
      %v2091 = vmul.f32 %v318, %v1946
      %v2092 = vmul.f32 %v319, %v1951
      %v2093 = vmul.f32 %v320, %v1951
      %v2094 = vmul.f32 %v321, %v1956
      %v2095 = vmul.f32 %v322, %v1956
      %v2096 = vmul.f32 %v323, %v1961
      %v2097 = vmul.f32 %v324, %v1961
      %v2098 = vmul.f32 %v325, %v1966
      %v2099 = vmul.f32 %v326, %v1966
      %v2100 = vmul.f32 %v327, %v1971
      %v2101 = vmul.f32 %v328, %v1971
      %v2102 = vmul.f32 %v329, %v1976
      %v2103 = vmul.f32 %v330, %v1976
      %v2104 = vmul.f32 %v331, %v1981
      %v2105 = vmul.f32 %v332, %v1981
      %v2106 = vmul.f32 %v333, %v1986
      %v2107 = vmul.f32 %v334, %v1986
      %v2108 = vmul.f32 %v335, %v1991
      %v2109 = vmul.f32 %v336, %v1991
      %v2110 = vmul.f32 %v337, %v1996
      %v2111 = vmul.f32 %v338, %v1996
      %v2112 = vmul.f32 %v339, %v2001
      %v2113 = vmul.f32 %v340, %v2001
      %v2114 = vmul.f32 %v341, %v2006
      %v2115 = vmul.f32 %v342, %v2006
      %v2116 = vmul.f32 %v343, %v2011
      %v2117 = vmul.f32 %v344, %v2011
      %v2118 = vmul.f32 %v345, %v2016
      %v2119 = vmul.f32 %v346, %v2016
      %v2120 = vmul.f32 %v347, %v2021
      %v2121 = vmul.f32 %v348, %v2021
      %v2122 = vmul.f32 %v349, %v2026
      %v2123 = vmul.f32 %v350, %v2026
      %v2124 = vmul.f32 %v351, %v2031
      %v2125 = vmul.f32 %v352, %v2031
      %v2126 = vmul.f32 %v353, %v2036
      %v2127 = vmul.f32 %v354, %v2036
      %v2128 = vmul.f32 %v355, %v2041
      %v2129 = vmul.f32 %v356, %v2041
      %v2130 = vmul.f32 %v357, %v2046
      %v2131 = vmul.f32 %v358, %v2046
      %v2132 = vadd.f32 %v1754, %v2048
      %v2133 = vadd.f32 %v1755, %v2049
      %v2134 = vadd.f32 %v1756, %v2050
      %v2135 = vadd.f32 %v1757, %v2051
      %v2136 = vadd.f32 %v1758, %v2052
      %v2137 = vadd.f32 %v1759, %v2053
      %v2138 = vadd.f32 %v1760, %v2054
      %v2139 = vadd.f32 %v1761, %v2055
      %v2140 = vadd.f32 %v1762, %v2056
      %v2141 = vadd.f32 %v1763, %v2057
      %v2142 = vadd.f32 %v1764, %v2058
      %v2143 = vadd.f32 %v1765, %v2059
      %v2144 = vadd.f32 %v1766, %v2060
      %v2145 = vadd.f32 %v1767, %v2061
      %v2146 = vadd.f32 %v1768, %v2062
      %v2147 = vadd.f32 %v1769, %v2063
      %v2148 = vadd.f32 %v1770, %v2064
      %v2149 = vadd.f32 %v1771, %v2065
      %v2150 = vadd.f32 %v1772, %v2066
      %v2151 = vadd.f32 %v1773, %v2067
      %v2152 = vadd.f32 %v1774, %v2068
      %v2153 = vadd.f32 %v1775, %v2069
      %v2154 = vadd.f32 %v1776, %v2070
      %v2155 = vadd.f32 %v1777, %v2071
      %v2156 = vadd.f32 %v1778, %v2072
      %v2157 = vadd.f32 %v1779, %v2073
      %v2158 = vadd.f32 %v1780, %v2074
      %v2159 = vadd.f32 %v1781, %v2075
      %v2160 = vadd.f32 %v1782, %v2076
      %v2161 = vadd.f32 %v1783, %v2077
      %v2162 = vadd.f32 %v1784, %v2078
      %v2163 = vadd.f32 %v1785, %v2079
      %v2164 = vadd.f32 %v1786, %v2080
      %v2165 = vadd.f32 %v1787, %v2081
      %v2166 = vadd.f32 %v1788, %v2082
      %v2167 = vadd.f32 %v1789, %v2083
      %v2168 = vadd.f32 %v1790, %v2084
      %v2169 = vadd.f32 %v1791, %v2085
      %v2170 = vadd.f32 %v1792, %v2086
      %v2171 = vadd.f32 %v1793, %v2087
      %v2172 = vadd.f32 %v1794, %v2088
      %v2173 = vadd.f32 %v1795, %v2089
      %v2174 = vadd.f32 %v1796, %v2090
      %v2175 = vadd.f32 %v1797, %v2091
      %v2176 = vadd.f32 %v1798, %v2092
      %v2177 = vadd.f32 %v1799, %v2093
      %v2178 = vadd.f32 %v1800, %v2094
      %v2179 = vadd.f32 %v1801, %v2095
      %v2180 = vadd.f32 %v1802, %v2096
      %v2181 = vadd.f32 %v1803, %v2097
      %v2182 = vadd.f32 %v1804, %v2098
      %v2183 = vadd.f32 %v1805, %v2099
      %v2184 = vadd.f32 %v1806, %v2100
      %v2185 = vadd.f32 %v1807, %v2101
      %v2186 = vadd.f32 %v1808, %v2102
      %v2187 = vadd.f32 %v1809, %v2103
      %v2188 = vadd.f32 %v1810, %v2104
      %v2189 = vadd.f32 %v1811, %v2105
      %v2190 = vadd.f32 %v1812, %v2106
      %v2191 = vadd.f32 %v1813, %v2107
      %v2192 = vadd.f32 %v1814, %v2108
      %v2193 = vadd.f32 %v1815, %v2109
      %v2194 = vadd.f32 %v1816, %v2110
      %v2195 = vadd.f32 %v1817, %v2111
      %v2196 = vadd.f32 %v1818, %v2112
      %v2197 = vadd.f32 %v1819, %v2113
      %v2198 = vadd.f32 %v1820, %v2114
      %v2199 = vadd.f32 %v1821, %v2115
      %v2200 = vadd.f32 %v1822, %v2116
      %v2201 = vadd.f32 %v1823, %v2117
      %v2202 = vadd.f32 %v1824, %v2118
      %v2203 = vadd.f32 %v1825, %v2119
      %v2204 = vadd.f32 %v1826, %v2120
      %v2205 = vadd.f32 %v1827, %v2121
      %v2206 = vadd.f32 %v1828, %v2122
      %v2207 = vadd.f32 %v1829, %v2123
      %v2208 = vadd.f32 %v1830, %v2124
      %v2209 = vadd.f32 %v1831, %v2125
      %v2210 = vadd.f32 %v1832, %v2126
      %v2211 = vadd.f32 %v1833, %v2127
      %v2212 = vadd.f32 %v1834, %v2128
      %v2213 = vadd.f32 %v1835, %v2129
      %v2214 = vadd.f32 %v1836, %v2130
      %v2215 = vadd.f32 %v1837, %v2131
      %2217 = vset.pattern.permute.xlu0 0
      %2218 = vperm.xlu0 %2217, %v1712
      %v2219 = vpop.permute.xlu0 %2218
      %2222 = vset.pattern.permute.xlu0 0
      %2223 = vperm.xlu0 %2222, %v1713
      %v2224 = vpop.permute.xlu0 %2223
      %2227 = vset.pattern.permute.xlu0 0
      %2228 = vperm.xlu0 %2227, %v1714
      %v2229 = vpop.permute.xlu0 %2228
      %2232 = vset.pattern.permute.xlu0 0
      %2233 = vperm.xlu0 %2232, %v1715
      %v2234 = vpop.permute.xlu0 %2233
      %2237 = vset.pattern.permute.xlu0 0
      %2238 = vperm.xlu0 %2237, %v1716
      %v2239 = vpop.permute.xlu0 %2238
      %2242 = vset.pattern.permute.xlu0 0
      %2243 = vperm.xlu0 %2242, %v1717
      %v2244 = vpop.permute.xlu0 %2243
      %2247 = vset.pattern.permute.xlu0 0
      %2248 = vperm.xlu0 %2247, %v1718
      %v2249 = vpop.permute.xlu0 %2248
      %2252 = vset.pattern.permute.xlu0 0
      %2253 = vperm.xlu0 %2252, %v1719
      %v2254 = vpop.permute.xlu0 %2253
      %2257 = vset.pattern.permute.xlu0 0
      %2258 = vperm.xlu0 %2257, %v1720
      %v2259 = vpop.permute.xlu0 %2258
      %2262 = vset.pattern.permute.xlu0 0
      %2263 = vperm.xlu0 %2262, %v1721
      %v2264 = vpop.permute.xlu0 %2263
      %2267 = vset.pattern.permute.xlu0 0
      %2268 = vperm.xlu0 %2267, %v1722
      %v2269 = vpop.permute.xlu0 %2268
      %2272 = vset.pattern.permute.xlu0 0
      %2273 = vperm.xlu0 %2272, %v1723
      %v2274 = vpop.permute.xlu0 %2273
      %2277 = vset.pattern.permute.xlu0 0
      %2278 = vperm.xlu0 %2277, %v1724
      %v2279 = vpop.permute.xlu0 %2278
      %2282 = vset.pattern.permute.xlu0 0
      %2283 = vperm.xlu0 %2282, %v1725
      %v2284 = vpop.permute.xlu0 %2283
      %2287 = vset.pattern.permute.xlu0 0
      %2288 = vperm.xlu0 %2287, %v1726
      %v2289 = vpop.permute.xlu0 %2288
      %2292 = vset.pattern.permute.xlu0 0
      %2293 = vperm.xlu0 %2292, %v1727
      %v2294 = vpop.permute.xlu0 %2293
      %2297 = vset.pattern.permute.xlu0 0
      %2298 = vperm.xlu0 %2297, %v1728
      %v2299 = vpop.permute.xlu0 %2298
      %2302 = vset.pattern.permute.xlu0 0
      %2303 = vperm.xlu0 %2302, %v1729
      %v2304 = vpop.permute.xlu0 %2303
      %2307 = vset.pattern.permute.xlu0 0
      %2308 = vperm.xlu0 %2307, %v1730
      %v2309 = vpop.permute.xlu0 %2308
      %2312 = vset.pattern.permute.xlu0 0
      %2313 = vperm.xlu0 %2312, %v1731
      %v2314 = vpop.permute.xlu0 %2313
      %2317 = vset.pattern.permute.xlu0 0
      %2318 = vperm.xlu0 %2317, %v1732
      %v2319 = vpop.permute.xlu0 %2318
      %2322 = vset.pattern.permute.xlu0 0
      %2323 = vperm.xlu0 %2322, %v1733
      %v2324 = vpop.permute.xlu0 %2323
      %2327 = vset.pattern.permute.xlu0 0
      %2328 = vperm.xlu0 %2327, %v1734
      %v2329 = vpop.permute.xlu0 %2328
      %2332 = vset.pattern.permute.xlu0 0
      %2333 = vperm.xlu0 %2332, %v1735
      %v2334 = vpop.permute.xlu0 %2333
      %2337 = vset.pattern.permute.xlu0 0
      %2338 = vperm.xlu0 %2337, %v1736
      %v2339 = vpop.permute.xlu0 %2338
      %2342 = vset.pattern.permute.xlu0 0
      %2343 = vperm.xlu0 %2342, %v1737
      %v2344 = vpop.permute.xlu0 %2343
      %2347 = vset.pattern.permute.xlu0 0
      %2348 = vperm.xlu0 %2347, %v1738
      %v2349 = vpop.permute.xlu0 %2348
      %2352 = vset.pattern.permute.xlu0 0
      %2353 = vperm.xlu0 %2352, %v1739
      %v2354 = vpop.permute.xlu0 %2353
      %2357 = vset.pattern.permute.xlu0 0
      %2358 = vperm.xlu0 %2357, %v1740
      %v2359 = vpop.permute.xlu0 %2358
      %2362 = vset.pattern.permute.xlu0 0
      %2363 = vperm.xlu0 %2362, %v1741
      %v2364 = vpop.permute.xlu0 %2363
      %2367 = vset.pattern.permute.xlu0 0
      %2368 = vperm.xlu0 %2367, %v1742
      %v2369 = vpop.permute.xlu0 %2368
      %2372 = vset.pattern.permute.xlu0 0
      %2373 = vperm.xlu0 %2372, %v1743
      %v2374 = vpop.permute.xlu0 %2373
      %2377 = vset.pattern.permute.xlu0 0
      %2378 = vperm.xlu0 %2377, %v1744
      %v2379 = vpop.permute.xlu0 %2378
      %2382 = vset.pattern.permute.xlu0 0
      %2383 = vperm.xlu0 %2382, %v1745
      %v2384 = vpop.permute.xlu0 %2383
      %2387 = vset.pattern.permute.xlu0 0
      %2388 = vperm.xlu0 %2387, %v1746
      %v2389 = vpop.permute.xlu0 %2388
      %2392 = vset.pattern.permute.xlu0 0
      %2393 = vperm.xlu0 %2392, %v1747
      %v2394 = vpop.permute.xlu0 %2393
      %2397 = vset.pattern.permute.xlu0 0
      %2398 = vperm.xlu0 %2397, %v1748
      %v2399 = vpop.permute.xlu0 %2398
      %2402 = vset.pattern.permute.xlu0 0
      %2403 = vperm.xlu0 %2402, %v1749
      %v2404 = vpop.permute.xlu0 %2403
      %2407 = vset.pattern.permute.xlu0 0
      %2408 = vperm.xlu0 %2407, %v1750
      %v2409 = vpop.permute.xlu0 %2408
      %2412 = vset.pattern.permute.xlu0 0
      %2413 = vperm.xlu0 %2412, %v1751
      %v2414 = vpop.permute.xlu0 %2413
      %2417 = vset.pattern.permute.xlu0 0
      %2418 = vperm.xlu0 %2417, %v1752
      %v2419 = vpop.permute.xlu0 %2418
      %2422 = vset.pattern.permute.xlu0 0
      %2423 = vperm.xlu0 %2422, %v1753
      %v2424 = vpop.permute.xlu0 %2423
      %v2426 = vadd.f32 %v2132, %v2219
      %v2427 = vadd.f32 %v2133, %v2219
      %v2428 = vadd.f32 %v2134, %v2224
      %v2429 = vadd.f32 %v2135, %v2224
      %v2430 = vadd.f32 %v2136, %v2229
      %v2431 = vadd.f32 %v2137, %v2229
      %v2432 = vadd.f32 %v2138, %v2234
      %v2433 = vadd.f32 %v2139, %v2234
      %v2434 = vadd.f32 %v2140, %v2239
      %v2435 = vadd.f32 %v2141, %v2239
      %v2436 = vadd.f32 %v2142, %v2244
      %v2437 = vadd.f32 %v2143, %v2244
      %v2438 = vadd.f32 %v2144, %v2249
      %v2439 = vadd.f32 %v2145, %v2249
      %v2440 = vadd.f32 %v2146, %v2254
      %v2441 = vadd.f32 %v2147, %v2254
      %v2442 = vadd.f32 %v2148, %v2259
      %v2443 = vadd.f32 %v2149, %v2259
      %v2444 = vadd.f32 %v2150, %v2264
      %v2445 = vadd.f32 %v2151, %v2264
      %v2446 = vadd.f32 %v2152, %v2269
      %v2447 = vadd.f32 %v2153, %v2269
      %v2448 = vadd.f32 %v2154, %v2274
      %v2449 = vadd.f32 %v2155, %v2274
      %v2450 = vadd.f32 %v2156, %v2279
      %v2451 = vadd.f32 %v2157, %v2279
      %v2452 = vadd.f32 %v2158, %v2284
      %v2453 = vadd.f32 %v2159, %v2284
      %v2454 = vadd.f32 %v2160, %v2289
      %v2455 = vadd.f32 %v2161, %v2289
      %v2456 = vadd.f32 %v2162, %v2294
      %v2457 = vadd.f32 %v2163, %v2294
      %v2458 = vadd.f32 %v2164, %v2299
      %v2459 = vadd.f32 %v2165, %v2299
      %v2460 = vadd.f32 %v2166, %v2304
      %v2461 = vadd.f32 %v2167, %v2304
      %v2462 = vadd.f32 %v2168, %v2309
      %v2463 = vadd.f32 %v2169, %v2309
      %v2464 = vadd.f32 %v2170, %v2314
      %v2465 = vadd.f32 %v2171, %v2314
      %v2466 = vadd.f32 %v2172, %v2319
      %v2467 = vadd.f32 %v2173, %v2319
      %v2468 = vadd.f32 %v2174, %v2324
      %v2469 = vadd.f32 %v2175, %v2324
      %v2470 = vadd.f32 %v2176, %v2329
      %v2471 = vadd.f32 %v2177, %v2329
      %v2472 = vadd.f32 %v2178, %v2334
      %v2473 = vadd.f32 %v2179, %v2334
      %v2474 = vadd.f32 %v2180, %v2339
      %v2475 = vadd.f32 %v2181, %v2339
      %v2476 = vadd.f32 %v2182, %v2344
      %v2477 = vadd.f32 %v2183, %v2344
      %v2478 = vadd.f32 %v2184, %v2349
      %v2479 = vadd.f32 %v2185, %v2349
      %v2480 = vadd.f32 %v2186, %v2354
      %v2481 = vadd.f32 %v2187, %v2354
      %v2482 = vadd.f32 %v2188, %v2359
      %v2483 = vadd.f32 %v2189, %v2359
      %v2484 = vadd.f32 %v2190, %v2364
      %v2485 = vadd.f32 %v2191, %v2364
      %v2486 = vadd.f32 %v2192, %v2369
      %v2487 = vadd.f32 %v2193, %v2369
      %v2488 = vadd.f32 %v2194, %v2374
      %v2489 = vadd.f32 %v2195, %v2374
      %v2490 = vadd.f32 %v2196, %v2379
      %v2491 = vadd.f32 %v2197, %v2379
      %v2492 = vadd.f32 %v2198, %v2384
      %v2493 = vadd.f32 %v2199, %v2384
      %v2494 = vadd.f32 %v2200, %v2389
      %v2495 = vadd.f32 %v2201, %v2389
      %v2496 = vadd.f32 %v2202, %v2394
      %v2497 = vadd.f32 %v2203, %v2394
      %v2498 = vadd.f32 %v2204, %v2399
      %v2499 = vadd.f32 %v2205, %v2399
      %v2500 = vadd.f32 %v2206, %v2404
      %v2501 = vadd.f32 %v2207, %v2404
      %v2502 = vadd.f32 %v2208, %v2409
      %v2503 = vadd.f32 %v2209, %v2409
      %v2504 = vadd.f32 %v2210, %v2414
      %v2505 = vadd.f32 %v2211, %v2414
      %v2506 = vadd.f32 %v2212, %v2419
      %v2507 = vadd.f32 %v2213, %v2419
      %v2508 = vadd.f32 %v2214, %v2424
      %v2509 = vadd.f32 %v2215, %v2424
      %v2510 = vmax.f32 %v2426, 0.0
      %v2511 = vmax.f32 %v2427, 0.0
      %v2512 = vmax.f32 %v2428, 0.0
      %v2513 = vmax.f32 %v2429, 0.0
      %v2514 = vmax.f32 %v2430, 0.0
      %v2515 = vmax.f32 %v2431, 0.0
      %v2516 = vmax.f32 %v2432, 0.0
      %v2517 = vmax.f32 %v2433, 0.0
      %v2518 = vmax.f32 %v2434, 0.0
      %v2519 = vmax.f32 %v2435, 0.0
      %v2520 = vmax.f32 %v2436, 0.0
      %v2521 = vmax.f32 %v2437, 0.0
      %v2522 = vmax.f32 %v2438, 0.0
      %v2523 = vmax.f32 %v2439, 0.0
      %v2524 = vmax.f32 %v2440, 0.0
      %v2525 = vmax.f32 %v2441, 0.0
      %v2526 = vmax.f32 %v2442, 0.0
      %v2527 = vmax.f32 %v2443, 0.0
      %v2528 = vmax.f32 %v2444, 0.0
      %v2529 = vmax.f32 %v2445, 0.0
      %v2530 = vmax.f32 %v2446, 0.0
      %v2531 = vmax.f32 %v2447, 0.0
      %v2532 = vmax.f32 %v2448, 0.0
      %v2533 = vmax.f32 %v2449, 0.0
      %v2534 = vmax.f32 %v2450, 0.0
      %v2535 = vmax.f32 %v2451, 0.0
      %v2536 = vmax.f32 %v2452, 0.0
      %v2537 = vmax.f32 %v2453, 0.0
      %v2538 = vmax.f32 %v2454, 0.0
      %v2539 = vmax.f32 %v2455, 0.0
      %v2540 = vmax.f32 %v2456, 0.0
      %v2541 = vmax.f32 %v2457, 0.0
      %v2542 = vmax.f32 %v2458, 0.0
      %v2543 = vmax.f32 %v2459, 0.0
      %v2544 = vmax.f32 %v2460, 0.0
      %v2545 = vmax.f32 %v2461, 0.0
      %v2546 = vmax.f32 %v2462, 0.0
      %v2547 = vmax.f32 %v2463, 0.0
      %v2548 = vmax.f32 %v2464, 0.0
      %v2549 = vmax.f32 %v2465, 0.0
      %v2550 = vmax.f32 %v2466, 0.0
      %v2551 = vmax.f32 %v2467, 0.0
      %v2552 = vmax.f32 %v2468, 0.0
      %v2553 = vmax.f32 %v2469, 0.0
      %v2554 = vmax.f32 %v2470, 0.0
      %v2555 = vmax.f32 %v2471, 0.0
      %v2556 = vmax.f32 %v2472, 0.0
      %v2557 = vmax.f32 %v2473, 0.0
      %v2558 = vmax.f32 %v2474, 0.0
      %v2559 = vmax.f32 %v2475, 0.0
      %v2560 = vmax.f32 %v2476, 0.0
      %v2561 = vmax.f32 %v2477, 0.0
      %v2562 = vmax.f32 %v2478, 0.0
      %v2563 = vmax.f32 %v2479, 0.0
      %v2564 = vmax.f32 %v2480, 0.0
      %v2565 = vmax.f32 %v2481, 0.0
      %v2566 = vmax.f32 %v2482, 0.0
      %v2567 = vmax.f32 %v2483, 0.0
      %v2568 = vmax.f32 %v2484, 0.0
      %v2569 = vmax.f32 %v2485, 0.0
      %v2570 = vmax.f32 %v2486, 0.0
      %v2571 = vmax.f32 %v2487, 0.0
      %v2572 = vmax.f32 %v2488, 0.0
      %v2573 = vmax.f32 %v2489, 0.0
      %v2574 = vmax.f32 %v2490, 0.0
      %v2575 = vmax.f32 %v2491, 0.0
      %v2576 = vmax.f32 %v2492, 0.0
      %v2577 = vmax.f32 %v2493, 0.0
      %v2578 = vmax.f32 %v2494, 0.0
      %v2579 = vmax.f32 %v2495, 0.0
      %v2580 = vmax.f32 %v2496, 0.0
      %v2581 = vmax.f32 %v2497, 0.0
      %v2582 = vmax.f32 %v2498, 0.0
      %v2583 = vmax.f32 %v2499, 0.0
      %v2584 = vmax.f32 %v2500, 0.0
      %v2585 = vmax.f32 %v2501, 0.0
      %v2586 = vmax.f32 %v2502, 0.0
      %v2587 = vmax.f32 %v2503, 0.0
      %v2588 = vmax.f32 %v2504, 0.0
      %v2589 = vmax.f32 %v2505, 0.0
      %v2590 = vmax.f32 %v2506, 0.0
      %v2591 = vmax.f32 %v2507, 0.0
      %v2592 = vmax.f32 %v2508, 0.0
      %v2593 = vmax.f32 %v2509, 0.0
      %2594 = vst [vmem:[%s273] sm:$0xff] %v2510
      %2595 = vst.msk [vmem:[%s273 + $0x8] sm:$0xff] %vm359, %v2511
      %2596 = vst [vmem:[%s273 + $0x10] sm:$0xff] %v2512
      %2597 = vst.msk [vmem:[%s273 + $0x18] sm:$0xff] %vm359, %v2513
      %2598 = vst [vmem:[%s273 + $0x20] sm:$0xff] %v2514
      %2599 = vst.msk [vmem:[%s273 + $0x28] sm:$0xff] %vm359, %v2515
      %2600 = vst [vmem:[%s273 + $0x30] sm:$0xff] %v2516
      %2601 = vst.msk [vmem:[%s273 + $0x38] sm:$0xff] %vm359, %v2517
      %2602 = vst [vmem:[%s273 + $0x40] sm:$0xff] %v2518
      %2603 = vst.msk [vmem:[%s273 + $0x48] sm:$0xff] %vm359, %v2519
      %2604 = vst [vmem:[%s273 + $0x50] sm:$0xff] %v2520
      %2605 = vst.msk [vmem:[%s273 + $0x58] sm:$0xff] %vm359, %v2521
      %2606 = vst [vmem:[%s273 + $0x60] sm:$0xff] %v2522
      %2607 = vst.msk [vmem:[%s273 + $0x68] sm:$0xff] %vm359, %v2523
      %2608 = vst [vmem:[%s273 + $0x70] sm:$0xff] %v2524
      %2609 = vst.msk [vmem:[%s273 + $0x78] sm:$0xff] %vm359, %v2525
      %2610 = vst [vmem:[%s273 + $0x80] sm:$0xff] %v2526
      %2611 = vst.msk [vmem:[%s273 + $0x88] sm:$0xff] %vm359, %v2527
      %2612 = vst [vmem:[%s273 + $0x90] sm:$0xff] %v2528
      %2613 = vst.msk [vmem:[%s273 + $0x98] sm:$0xff] %vm359, %v2529
      %2614 = vst [vmem:[%s273 + $0xa0] sm:$0xff] %v2530
      %2615 = vst.msk [vmem:[%s273 + $0xa8] sm:$0xff] %vm359, %v2531
      %2616 = vst [vmem:[%s273 + $0xb0] sm:$0xff] %v2532
      %2617 = vst.msk [vmem:[%s273 + $0xb8] sm:$0xff] %vm359, %v2533
      %2618 = vst [vmem:[%s273 + $0xc0] sm:$0xff] %v2534
      %2619 = vst.msk [vmem:[%s273 + $0xc8] sm:$0xff] %vm359, %v2535
      %2620 = vst [vmem:[%s273 + $0xd0] sm:$0xff] %v2536
      %2621 = vst.msk [vmem:[%s273 + $0xd8] sm:$0xff] %vm359, %v2537
      %2622 = vst [vmem:[%s273 + $0xe0] sm:$0xff] %v2538
      %2623 = vst.msk [vmem:[%s273 + $0xe8] sm:$0xff] %vm359, %v2539
      %2624 = vst [vmem:[%s273 + $0xf0] sm:$0xff] %v2540
      %2625 = vst.msk [vmem:[%s273 + $0xf8] sm:$0xff] %vm359, %v2541
      %2626 = vst [vmem:[%s273 + $0x100] sm:$0xff] %v2542
      %2627 = vst.msk [vmem:[%s273 + $0x108] sm:$0xff] %vm359, %v2543
      %2628 = vst [vmem:[%s273 + $0x110] sm:$0xff] %v2544
      %2629 = vst.msk [vmem:[%s273 + $0x118] sm:$0xff] %vm359, %v2545
      %2630 = vst [vmem:[%s273 + $0x120] sm:$0xff] %v2546
      %2631 = vst.msk [vmem:[%s273 + $0x128] sm:$0xff] %vm359, %v2547
      %2632 = vst [vmem:[%s273 + $0x130] sm:$0xff] %v2548
      %2633 = vst.msk [vmem:[%s273 + $0x138] sm:$0xff] %vm359, %v2549
      %2634 = vst [vmem:[%s273 + $0x140] sm:$0xff] %v2550
      %2635 = vst.msk [vmem:[%s273 + $0x148] sm:$0xff] %vm359, %v2551
      %2636 = vst [vmem:[%s273 + $0x150] sm:$0xff] %v2552
      %2637 = vst.msk [vmem:[%s273 + $0x158] sm:$0xff] %vm359, %v2553
      %2638 = vst [vmem:[%s273 + $0x160] sm:$0xff] %v2554
      %2639 = vst.msk [vmem:[%s273 + $0x168] sm:$0xff] %vm359, %v2555
      %2640 = vst [vmem:[%s273 + $0x170] sm:$0xff] %v2556
      %2641 = vst.msk [vmem:[%s273 + $0x178] sm:$0xff] %vm359, %v2557
      %2642 = vst [vmem:[%s273 + $0x180] sm:$0xff] %v2558
      %2643 = vst.msk [vmem:[%s273 + $0x188] sm:$0xff] %vm359, %v2559
      %2644 = vst [vmem:[%s273 + $0x190] sm:$0xff] %v2560
      %2645 = vst.msk [vmem:[%s273 + $0x198] sm:$0xff] %vm359, %v2561
      %2646 = vst [vmem:[%s273 + $0x1a0] sm:$0xff] %v2562
      %2647 = vst.msk [vmem:[%s273 + $0x1a8] sm:$0xff] %vm359, %v2563
      %2648 = vst [vmem:[%s273 + $0x1b0] sm:$0xff] %v2564
      %2649 = vst.msk [vmem:[%s273 + $0x1b8] sm:$0xff] %vm359, %v2565
      %2650 = vst [vmem:[%s273 + $0x1c0] sm:$0xff] %v2566
      %2651 = vst.msk [vmem:[%s273 + $0x1c8] sm:$0xff] %vm359, %v2567
      %2652 = vst [vmem:[%s273 + $0x1d0] sm:$0xff] %v2568
      %2653 = vst.msk [vmem:[%s273 + $0x1d8] sm:$0xff] %vm359, %v2569
      %2654 = vst [vmem:[%s273 + $0x1e0] sm:$0xff] %v2570
      %2655 = vst.msk [vmem:[%s273 + $0x1e8] sm:$0xff] %vm359, %v2571
      %2656 = vst [vmem:[%s273 + $0x1f0] sm:$0xff] %v2572
      %2657 = vst.msk [vmem:[%s273 + $0x1f8] sm:$0xff] %vm359, %v2573
      %2658 = vst [vmem:[%s273 + $0x200] sm:$0xff] %v2574
      %2659 = vst.msk [vmem:[%s273 + $0x208] sm:$0xff] %vm359, %v2575
      %2660 = vst [vmem:[%s273 + $0x210] sm:$0xff] %v2576
      %2661 = vst.msk [vmem:[%s273 + $0x218] sm:$0xff] %vm359, %v2577
      %2662 = vst [vmem:[%s273 + $0x220] sm:$0xff] %v2578
      %2663 = vst.msk [vmem:[%s273 + $0x228] sm:$0xff] %vm359, %v2579
      %2664 = vst [vmem:[%s273 + $0x230] sm:$0xff] %v2580
      %2665 = vst.msk [vmem:[%s273 + $0x238] sm:$0xff] %vm359, %v2581
      %2666 = vst [vmem:[%s273 + $0x240] sm:$0xff] %v2582
      %2667 = vst.msk [vmem:[%s273 + $0x248] sm:$0xff] %vm359, %v2583
      %2668 = vst [vmem:[%s273 + $0x250] sm:$0xff] %v2584
      %2669 = vst.msk [vmem:[%s273 + $0x258] sm:$0xff] %vm359, %v2585
      %2670 = vst [vmem:[%s273 + $0x260] sm:$0xff] %v2586
      %2671 = vst.msk [vmem:[%s273 + $0x268] sm:$0xff] %vm359, %v2587
      %2672 = vst [vmem:[%s273 + $0x270] sm:$0xff] %v2588
      %2673 = vst.msk [vmem:[%s273 + $0x278] sm:$0xff] %vm359, %v2589
      %2674 = vst [vmem:[%s273 + $0x280] sm:$0xff] %v2590
      %2675 = vst.msk [vmem:[%s273 + $0x288] sm:$0xff] %vm359, %v2591
      %2676 = vst [vmem:[%s273 + $0x290] sm:$0xff] %v2592
      %2677 = vst.msk [vmem:[%s273 + $0x298] sm:$0xff] %vm359, %v2593
      %s2678 = smul.u32 42, %s15
      %p2679 = scmp.lt.s32.totalorder %s2678, 167
      %s2680 = scalar_select %p2679, %s2678, 167
      %s2681 = smul.addr %s2680, 2
      %s2682 = smul.addr %s2681, 8
      %s2683 = scalar_lea.vmem %s4, %s2682
      // Predicated region
      $region37: #{tpu_custom_call.1} parent=35 // pred_check
        %p2684 = pneg %p137
      $region38: #{tpu_custom_call.1} parent=35 // pred_check_branch
        %2686 = sbr.rel (%p2684) target = $region40
      $region39: #{tpu_custom_call.1} parent=35 // pred_region
        %s2687 = smul.u32 42, %s15
      $region40: #{tpu_custom_call.1} parent=35 // pred_fallthru
        _
    $region36: #{tpu_custom_call.1} parent=5 // pred_fallthru
      _
    %p2688 = scmp.le.s32.totalorder 2, %s10
    // Predicated region
    $region41: #{tpu_custom_call.1} parent=5 // pred_check
      %p2689 = pneg %p2688
    $region42: #{tpu_custom_call.1} parent=5 // pred_check_branch
      %2691 = sbr.rel (%p2689) target = $region44
    $region43: #{tpu_custom_call.1} parent=5 // pred_region
      %s2692 = ssub.s32 %s10, 2
      // Predicated region
      $region45: #{tpu_custom_call.1} parent=43 // pred_check
        %p2693 = pneg %p143
      $region46: #{tpu_custom_call.1} parent=43 // pred_check_branch
        %2695 = sbr.rel (%p2693) target = $region48
      $region47: #{tpu_custom_call.1} parent=43 // pred_region
        %s2696 = smul.u32 42, %s16
        %p2697 = scmp.lt.s32.totalorder %s2696, 167
        %s2698 = scalar_select %p2697, %s2696, 167
        %s2699 = smul.addr %s2698, 2
        %s2700 = smul.addr %s2699, 8
        %s2701 = scalar_lea.vmem %s4, %s2700
      $region48: #{tpu_custom_call.1} parent=43 // pred_fallthru
        _
    $region44: #{tpu_custom_call.1} parent=5 // pred_fallthru
      _
  $region6: #{tpu_custom_call.1} parent=0 // loop_footer
    %s14 = sadd.s32 1, %s10
  $region7: #{tpu_custom_call.1} parent=0 // loop_footer_branch
    %9 = sbr.rel target = $region3
  $region8: #{tpu_custom_call.1} parent=0 // loop_exit
    _

</llo_original>
